<compile_context>
chip_gen: v5e
topology: v5e:2x2
jax: 0.10.0
libtpu: 0.0.40
codegen_flags: <defaults>
</compile_context>

<pallas_src>
import jax
import jax.numpy as jnp
from jax.experimental import pallas as pl
from jax.experimental.pallas import tpu as pltpu


def _linear_kernel(x_ref, w_ref, b_ref, o_ref):
    # x_ref: (TM, F)  batch rows on sublanes, the 13 features on lanes
    # w_ref: (1, F)   broadcast over the sublane (batch) axis
    # b_ref: (1, 1)   scalar bias in SMEM
    # o_ref: (TM, 1)  per-row result
    prod = x_ref[...] * w_ref[...]                              # VPU broadcast multiply
    o_ref[...] = jnp.sum(prod, axis=-1, keepdims=True) + b_ref[0, 0]  # XLU lane reduce


def _round_up(n, m):
    return ((n + m - 1) // m) * m


def simple_model_forward(x, weight, bias, *, block_rows=8192, min_pallas_rows=2048):
    """y = x @ weight.T + bias   (PyTorch nn.Linear(F, 1) semantics).

    x:      (B, F) float32  (row-major, as produced by the dataframe)
    weight: (1, F) float32  (PyTorch Linear stores (out_features, in_features))
    bias:   (1,)   float32
    returns (B, 1) float32
    """
    B, F = x.shape
    x = x.astype(jnp.float32)
    w_row = weight.reshape(1, F).astype(jnp.float32)   # metadata-only reshape
    b_col = bias.reshape(1, 1).astype(jnp.float32)

    # Toy batches: a pallas_call launch costs more than XLA's fused matvec.
    if B < max(min_pallas_rows, 8):
        return x @ weight.reshape(F, 1).astype(jnp.float32) + b_col

    # Tile selection:
    #  - aim for >= 2 tiles so v7x's two TensorCores both get work,
    #  - cap per-tile rows (lane-padded (TM,13) f32 => TM*512 B per buffer) so the
    #    double-buffered pipeline stays well inside v7x's 64 MiB VMEM,
    #  - keep TM a multiple of 8 (sublane alignment).
    tm = min(block_rows, _round_up(pl.cdiv(B, 2), 8))
    tm = max(tm, 8)
    grid = (pl.cdiv(B, tm),)   # ragged tail handled by masked boundary block

    return pl.pallas_call(
        _linear_kernel,
        out_shape=jax.ShapeDtypeStruct((B, 1), jnp.float32),
        grid=grid,
        in_specs=[
            pl.BlockSpec((tm, F), lambda i: (i, 0)),             # streaming x tile
            pl.BlockSpec((1, F), lambda i: (0, 0)),              # resident weight row
            pl.BlockSpec(memory_space=pltpu.MemorySpace.SMEM),   # scalar bias
        ],
        out_specs=pl.BlockSpec((tm, 1), lambda i: (i, 0)),
        compiler_params=pltpu.CompilerParams(
            dimension_semantics=("parallel",),                   # shard tiles across TCs
        ),
    )(x, w_row, b_col)


if __name__ == "__main__":
    F = 13                                       # Boston housing feature count
    key = jax.random.PRNGKey(0)
    kx1, kx2, kx3, kw, kb = jax.random.split(key, 5)

    bound = 1.0 / (F ** 0.5)                     # mimic nn.Linear's uniform init
    weight = jax.random.uniform(kw, (1, F), minval=-bound, maxval=bound,
                                dtype=jnp.float32)
    bias = jax.random.uniform(kb, (1,), minval=-bound, maxval=bound,
                              dtype=jnp.float32)

    # Case 1: Pallas path, 2 parallel tiles (tm = 2048, grid = (2,)).
    x1 = jax.random.normal(kx1, (4096, F), dtype=jnp.float32)
    y1 = jax.block_until_ready(simple_model_forward(x1, weight, bias))
    ref1 = x1 @ weight.T + bias
    assert y1.shape == (4096, 1)
    assert jnp.allclose(y1, ref1, atol=1e-5, rtol=1e-5)

    # Case 2: Boston-housing-sized ragged batch forced through the kernel
    # (tm = 256, grid = (2,), partial last block -> exercises masked boundary).
    x2 = jax.random.normal(kx2, (506, F), dtype=jnp.float32)
    y2 = jax.block_until_ready(
        simple_model_forward(x2, weight, bias, min_pallas_rows=0))
    ref2 = x2 @ weight.T + bias
    assert y2.shape == (506, 1)
    assert jnp.allclose(y2, ref2, atol=1e-5, rtol=1e-5)

    # Case 3: tiny batch takes the plain-jnp fast path.
    x3 = jax.random.normal(kx3, (8, F), dtype=jnp.float32)
    y3 = jax.block_until_ready(simple_model_forward(x3, weight, bias))
    ref3 = x3 @ weight.T + bias
    assert y3.shape == (8, 1)
    assert jnp.allclose(y3, ref3, atol=1e-5, rtol=1e-5)

    print("KERNEL_OK")
</pallas_src>

<mosaic_0001>
module attributes {stable_mosaic.version = 11 : i64} {
  func.func @_linear_kernel(%arg0: i32, %arg1: memref<2048x13xf32, #tpu.memory_space<vmem>>, %arg2: memref<1x13xf32, #tpu.memory_space<vmem>>, %arg3: memref<1x1xf32, #tpu.memory_space<smem>>, %arg4: memref<2048x1xf32, #tpu.memory_space<vmem>>) attributes {dimension_semantics = [#tpu.dimension_semantics<parallel>], iteration_bounds = array<i64: 2>, scalar_prefetch = 0 : i64, scratch_operands = 0 : i64, tpu.core_type = #tpu.core_type<tc>, window_params = [{transform_indices = @transform_0, window_bounds = array<i64: 2048, 13>}, {pipeline_mode = #tpu.pipeline_mode<synchronous>, transform_indices = @transform_1, window_bounds = array<i64: 1, 13>}, {transform_indices = @transform_2, window_bounds = array<i64: 1, 1>}, {transform_indices = @transform_3, window_bounds = array<i64: 2048, 1>}]} {
    %c0 = arith.constant 0 : index
    %c0_0 = arith.constant 0 : index
    %0 = vector.load %arg1[%c0, %c0_0] : memref<2048x13xf32, #tpu.memory_space<vmem>>, vector<2048x13xf32>
    %c0_1 = arith.constant 0 : index
    %c0_2 = arith.constant 0 : index
    %1 = vector.load %arg2[%c0_1, %c0_2] : memref<1x13xf32, #tpu.memory_space<vmem>>, vector<1x13xf32>
    %2 = vector.broadcast %1 : vector<1x13xf32> to vector<2048x13xf32>
    %3 = arith.mulf %0, %2 : vector<2048x13xf32>
    %cst = arith.constant dense<0.000000e+00> : vector<2048xf32>
    %4 = vector.multi_reduction <add>, %3, %cst [1] : vector<2048x13xf32> to vector<2048xf32>
    %5 = vector.shape_cast %4 : vector<2048xf32> to vector<2048x1xf32>
    %c0_3 = arith.constant 0 : index
    %c0_4 = arith.constant 0 : index
    %6 = memref.load %arg3[%c0_3, %c0_4] : memref<1x1xf32, #tpu.memory_space<smem>>
    %7 = vector.broadcast %6 : f32 to vector<2048x1xf32>
    %8 = arith.addf %5, %7 : vector<2048x1xf32>
    %c0_5 = arith.constant 0 : index
    %c0_6 = arith.constant 0 : index
    %9 = vector.load %arg4[%c0_5, %c0_6] : memref<2048x1xf32, #tpu.memory_space<vmem>>, vector<2048x1xf32>
    tpu.vector_store %arg4[%c0_5, %c0_6], %8 {strides = array<i32>} : memref<2048x1xf32, #tpu.memory_space<vmem>>, vector<2048x1xf32>,
    return
  }
  func.func @transform_0(%arg0: i32) -> (i32, i32) {
    %c0_i32 = arith.constant 0 : i32
    %c0_i32_0 = arith.constant 0 : i32
    return %arg0, %c0_i32 : i32, i32
  }
  func.func @transform_1(%arg0: i32) -> (i32, i32) {
    %c0_i32 = arith.constant 0 : i32
    %c0_i32_0 = arith.constant 0 : i32
    %c0_i32_1 = arith.constant 0 : i32
    return %c0_i32, %c0_i32_0 : i32, i32
  }
  func.func @transform_2(%arg0: i32) -> (i32, i32) {
    %c0_i32 = arith.constant 0 : i32
    %c0_i32_0 = arith.constant 0 : i32
    %c0_i32_1 = arith.constant 0 : i32
    return %c0_i32, %c0_i32_0 : i32, i32
  }
  func.func @transform_3(%arg0: i32) -> (i32, i32) {
    %c0_i32 = arith.constant 0 : i32
    %c0_i32_0 = arith.constant 0 : i32
    return %arg0, %c0_i32 : i32, i32
  }
}

</mosaic_0001>

<llo_original>
// kernel: tpu_custom_call.1
$region0: #{tpu_custom_call.1}
  #allocation0 [shape = 'u32[]', space=smem, size = 0x4, offset = 0x4, fixed_abs, tag = 'smem constant byte address 0x4 - core index']
  #allocation1 [shape = 'u32[72,128]{1,0:T(1,128)}', space=vmem, size = 0x9000, scoped, tag = 'internal scratch']
  #allocation2 [shape = 'f32[1,1]{1,0:T(1,128)S(6)}', space=smem, size = 0x200, scoped, tag = 'scoped memory for tpu_custom_call.1']
  %s0 = inlined_call_operand.vmem [shape: f32[4096,13], index: 0, kind: input, shape index: {}]
  %s1 = inlined_call_operand.vmem [shape: f32[1,13], index: 1, kind: input, shape index: {}]
  %s2 = inlined_call_operand.<no memory space> [shape: f32[1,1], index: 2, kind: input, shape index: {}]
  %s3 = inlined_call_operand.vmem [shape: f32[4096,1], index: 3, kind: output, shape index: {}]
  %s4 = sld [smem:[#allocation0]]
  $region45: #{tpu_custom_call.1} parent=0
    _
  %s6 = ssub.s32 1, %s4
  %s7 = scalar_select 0, %s6, %s4
  %8 = sst [smem:[#allocation2]] %s2
  loop: start=0, step=1, limit=4
  $region2: #{tpu_custom_call.1} parent=0 // loop_pre_header
    _
  $region3: #{tpu_custom_call.1} parent=0 // loop_header
    %s10 = sphi 0, %s14
    %p11 = scmp.ge.s32.totalorder %s10, 4
    %s20 = sphi 0, %s22
    %s23 = sphi 0, %s20
    %s24 = sphi 0, %s23
    %s40 = sphi 0, %s24
    %s44 = sphi 0, %s44
    %s46 = sphi 0, %s44
    %s47 = sphi 0, %s46
    %s61 = sphi 0, %s47
    %s65 = sphi 0, %s65
    %s67 = sphi 0, %s65
    %s68 = sphi 0, %s67
    %s82 = sphi 0, %s68
    %s88 = sphi 0, %s90
    %s91 = sphi 0, %s88
    %s92 = sphi 0, %s91
    %s108 = sphi 0, %s92
  $region4: #{tpu_custom_call.1} parent=0 // loop_header_branch
    %13 = sbr.rel (%p11) target = $region8
  $region5: #{tpu_custom_call.1} parent=0 // loop_body
    %s15 = ssub.s32 %s10, 1
    %s16 = ssub.s32 %s10, 2
    %s17 = sadd.s32 %s10, 1
    %s18 = ssub.s32 %s10, %s17
    %p19 = scmp.eq.s32.totalorder %s18, 0
    %s21 = sadd.s32 %s20, 1
    %s22 = scalar_select %p19, %s20, %s21
    %p25 = pneg %p19
    %p26 = scmp.eq.s32.totalorder %s10, 1
    %p27 = por %p25, %p26
    %p28 = scmp.ne.s32.totalorder %s20, %s23
    %p29 = scmp.eq.s32.totalorder %s10, 0
    %p30 = por %p28, %p29
    %p31 = scmp.ne.s32.totalorder %s20, %s23
    %p32 = scmp.eq.s32.totalorder %s15, 1
    %p33 = por %p31, %p32
    %p34 = scmp.ne.s32.totalorder %s23, %s24
    %p35 = scmp.eq.s32.totalorder %s15, 0
    %p36 = por %p34, %p35
    %p37 = scmp.ne.s32.totalorder %s23, %s24
    %p38 = scmp.eq.s32.totalorder %s16, 1
    %p39 = por %p37, %p38
    %p41 = scmp.ne.s32.totalorder %s24, %s40
    %p42 = scmp.eq.s32.totalorder %s16, 0
    %p43 = por %p41, %p42
    %s45 = sadd.s32 %s44, 1
    %p48 = scmp.eq.s32.totalorder %s10, 1
    %p49 = scmp.ne.s32.totalorder %s44, %s46
    %p50 = scmp.eq.s32.totalorder %s10, 0
    %p51 = por %p49, %p50
    %p52 = scmp.ne.s32.totalorder %s44, %s46
    %p53 = scmp.eq.s32.totalorder %s15, 1
    %p54 = por %p52, %p53
    %p55 = scmp.ne.s32.totalorder %s46, %s47
    %p56 = scmp.eq.s32.totalorder %s15, 0
    %p57 = por %p55, %p56
    %p58 = scmp.ne.s32.totalorder %s46, %s47
    %p59 = scmp.eq.s32.totalorder %s16, 1
    %p60 = por %p58, %p59
    %p62 = scmp.ne.s32.totalorder %s47, %s61
    %p63 = scmp.eq.s32.totalorder %s16, 0
    %p64 = por %p62, %p63
    %s66 = sadd.s32 %s65, 1
    %p69 = scmp.eq.s32.totalorder %s10, 1
    %p70 = scmp.ne.s32.totalorder %s65, %s67
    %p71 = scmp.eq.s32.totalorder %s10, 0
    %p72 = por %p70, %p71
    %p73 = scmp.ne.s32.totalorder %s65, %s67
    %p74 = scmp.eq.s32.totalorder %s15, 1
    %p75 = por %p73, %p74
    %p76 = scmp.ne.s32.totalorder %s67, %s68
    %p77 = scmp.eq.s32.totalorder %s15, 0
    %p78 = por %p76, %p77
    %p79 = scmp.ne.s32.totalorder %s67, %s68
    %p80 = scmp.eq.s32.totalorder %s16, 1
    %p81 = por %p79, %p80
    %p83 = scmp.ne.s32.totalorder %s68, %s82
    %p84 = scmp.eq.s32.totalorder %s16, 0
    %p85 = por %p83, %p84
    %s86 = ssub.s32 %s10, %s17
    %p87 = scmp.eq.s32.totalorder %s86, 0
    %s89 = sadd.s32 %s88, 1
    %s90 = scalar_select %p87, %s88, %s89
    %p93 = pneg %p87
    %p94 = scmp.eq.s32.totalorder %s10, 1
    %p95 = por %p93, %p94
    %p96 = scmp.ne.s32.totalorder %s88, %s91
    %p97 = scmp.eq.s32.totalorder %s10, 0
    %p98 = por %p96, %p97
    %p99 = scmp.ne.s32.totalorder %s88, %s91
    %p100 = scmp.eq.s32.totalorder %s15, 1
    %p101 = por %p99, %p100
    %p102 = scmp.ne.s32.totalorder %s91, %s92
    %p103 = scmp.eq.s32.totalorder %s15, 0
    %p104 = por %p102, %p103
    %p105 = scmp.ne.s32.totalorder %s91, %s92
    %p106 = scmp.eq.s32.totalorder %s16, 1
    %p107 = por %p105, %p106
    %p109 = scmp.ne.s32.totalorder %s92, %s108
    %p110 = scmp.eq.s32.totalorder %s16, 0
    %p111 = por %p109, %p110
    %p112 = scmp.le.s32.totalorder 1, %s10
    %p113 = scmp.lt.s32.totalorder %s10, 3
    %p114 = pnand %p112, %p113
    %p115 = pneg %p114
    // Predicated region
    $region9: #{tpu_custom_call.1} parent=5 // pred_check
      _
    $region10: #{tpu_custom_call.1} parent=5 // pred_check_branch
      %117 = sbr.rel (%p114) target = $region12
    $region11: #{tpu_custom_call.1} parent=5 // pred_region
      %s118 = ssub.s32 %s10, 1
      // Predicated region
      $region13: #{tpu_custom_call.1} parent=11 // pred_check
        %p119 = pneg %p57
      $region14: #{tpu_custom_call.1} parent=11 // pred_check_branch
        %121 = sbr.rel (%p119) target = $region16
      $region15: #{tpu_custom_call.1} parent=11 // pred_region
        _
      $region16: #{tpu_custom_call.1} parent=11 // pred_fallthru
        _
      // Predicated region
      $region17: #{tpu_custom_call.1} parent=11 // pred_check
        %p122 = pneg %p78
      $region18: #{tpu_custom_call.1} parent=11 // pred_check_branch
        %124 = sbr.rel (%p122) target = $region20
      $region19: #{tpu_custom_call.1} parent=11 // pred_region
        _
      $region20: #{tpu_custom_call.1} parent=11 // pred_fallthru
        _
    $region12: #{tpu_custom_call.1} parent=5 // pred_fallthru
      _
    %p125 = scmp.lt.s32.totalorder %s10, 2
    // Predicated region
    $region21: #{tpu_custom_call.1} parent=5 // pred_check
      %p126 = pneg %p125
    $region22: #{tpu_custom_call.1} parent=5 // pred_check_branch
      %128 = sbr.rel (%p126) target = $region24
    $region23: #{tpu_custom_call.1} parent=5 // pred_region
      // Predicated region
      $region25: #{tpu_custom_call.1} parent=23 // pred_check
        %p129 = pneg %p30
      $region26: #{tpu_custom_call.1} parent=23 // pred_check_branch
        %131 = sbr.rel (%p129) target = $region28
      $region27: #{tpu_custom_call.1} parent=23 // pred_region
        %s132 = smul.u32 256, %s10
        %p133 = scmp.lt.s32.totalorder %s132, 511
        %s134 = scalar_select %p133, %s132, 511
        %s135 = smul.addr %s134, 8
        %s136 = scalar_lea.vmem %s0, %s135
        %s137 = smul.u32 256, %s10
      $region28: #{tpu_custom_call.1} parent=23 // pred_fallthru
        _
    $region24: #{tpu_custom_call.1} parent=5 // pred_fallthru
      _
    %p138 = scmp.le.s32.totalorder 1, %s10
    %p139 = scmp.lt.s32.totalorder %s10, 3
    %p140 = pnand %p138, %p139
    %p141 = pneg %p140
    // Predicated region
    $region29: #{tpu_custom_call.1} parent=5 // pred_check
      _
    $region30: #{tpu_custom_call.1} parent=5 // pred_check_branch
      %143 = sbr.rel (%p140) target = $region32
    $region31: #{tpu_custom_call.1} parent=5 // pred_region
      %s144 = ssub.s32 %s10, 1
      %s145 = smul.u32 256, %s15
      %p146 = scmp.lt.s32.totalorder %s145, 511
      %s147 = scalar_select %p146, %s145, 511
      %s148 = smul.addr %s147, 8
      %s149 = scalar_lea.vmem %s0, %s148
      %p150 = pneg %p36
      %p151 = pneg %p33
      %p152 = pneg %p57
      %p153 = pneg %p54
      %p154 = pneg %p78
      %p155 = pneg %p75
      %p156 = pneg %p104
      %p157 = pneg %p101
      %s158 = smul.u32 256, %s15
      %p159 = scmp.lt.s32.totalorder %s158, 511
      %s160 = scalar_select %p159, %s158, 511
      %s161 = smul.addr %s160, 8
      %s162 = scalar_lea.vmem %s3, %s161
      %s163 = smul.u32 256, %s15
      %p164 = scmp.lt.s32.totalorder %s163, 511
      %s165 = scalar_select %p164, %s163, 511
      %s166 = smul.addr %s165, 8
      %s167 = scalar_lea.vmem %s0, %s166
      %s168 = smul.u32 256, %s15
      %s169 = smul.u32 256, %s15
      %p170 = scmp.lt.s32.totalorder %s169, 511
      %s171 = scalar_select %p170, %s169, 511
      %s172 = smul.addr %s171, 8
      %s173 = scalar_lea.vmem %s3, %s172
      %s174 = smul.u32 256, %s15
      %v175 = vld [vmem:[%s167] sm:$0xff]
      %v176 = vld [vmem:[%s167 + $0x8] sm:$0xff]
      %v177 = vld [vmem:[%s167 + $0x10] sm:$0xff]
      %v178 = vld [vmem:[%s167 + $0x18] sm:$0xff]
      %v179 = vld [vmem:[%s167 + $0x20] sm:$0xff]
      %v180 = vld [vmem:[%s167 + $0x28] sm:$0xff]
      %v181 = vld [vmem:[%s167 + $0x30] sm:$0xff]
      %v182 = vld [vmem:[%s167 + $0x38] sm:$0xff]
      %v183 = vld [vmem:[%s167 + $0x40] sm:$0xff]
      %v184 = vld [vmem:[%s167 + $0x48] sm:$0xff]
      %v185 = vld [vmem:[%s167 + $0x50] sm:$0xff]
      %v186 = vld [vmem:[%s167 + $0x58] sm:$0xff]
      %v187 = vld [vmem:[%s167 + $0x60] sm:$0xff]
      %v188 = vld [vmem:[%s167 + $0x68] sm:$0xff]
      %v189 = vld [vmem:[%s167 + $0x70] sm:$0xff]
      %v190 = vld [vmem:[%s167 + $0x78] sm:$0xff]
      %v191 = vld [vmem:[%s167 + $0x80] sm:$0xff]
      %v192 = vld [vmem:[%s167 + $0x88] sm:$0xff]
      %v193 = vld [vmem:[%s167 + $0x90] sm:$0xff]
      %v194 = vld [vmem:[%s167 + $0x98] sm:$0xff]
      %v195 = vld [vmem:[%s167 + $0xa0] sm:$0xff]
      %v196 = vld [vmem:[%s167 + $0xa8] sm:$0xff]
      %v197 = vld [vmem:[%s167 + $0xb0] sm:$0xff]
      %v198 = vld [vmem:[%s167 + $0xb8] sm:$0xff]
      %v199 = vld [vmem:[%s167 + $0xc0] sm:$0xff]
      %v200 = vld [vmem:[%s167 + $0xc8] sm:$0xff]
      %v201 = vld [vmem:[%s167 + $0xd0] sm:$0xff]
      %v202 = vld [vmem:[%s167 + $0xd8] sm:$0xff]
      %v203 = vld [vmem:[%s167 + $0xe0] sm:$0xff]
      %v204 = vld [vmem:[%s167 + $0xe8] sm:$0xff]
      %v205 = vld [vmem:[%s167 + $0xf0] sm:$0xff]
      %v206 = vld [vmem:[%s167 + $0xf8] sm:$0xff]
      %v207 = vld [vmem:[%s167 + $0x100] sm:$0xff]
      %v208 = vld [vmem:[%s167 + $0x108] sm:$0xff]
      %v209 = vld [vmem:[%s167 + $0x110] sm:$0xff]
      %v210 = vld [vmem:[%s167 + $0x118] sm:$0xff]
      %v211 = vld [vmem:[%s167 + $0x120] sm:$0xff]
      %v212 = vld [vmem:[%s167 + $0x128] sm:$0xff]
      %v213 = vld [vmem:[%s167 + $0x130] sm:$0xff]
      %v214 = vld [vmem:[%s167 + $0x138] sm:$0xff]
      %v215 = vld [vmem:[%s167 + $0x140] sm:$0xff]
      %v216 = vld [vmem:[%s167 + $0x148] sm:$0xff]
      %v217 = vld [vmem:[%s167 + $0x150] sm:$0xff]
      %v218 = vld [vmem:[%s167 + $0x158] sm:$0xff]
      %v219 = vld [vmem:[%s167 + $0x160] sm:$0xff]
      %v220 = vld [vmem:[%s167 + $0x168] sm:$0xff]
      %v221 = vld [vmem:[%s167 + $0x170] sm:$0xff]
      %v222 = vld [vmem:[%s167 + $0x178] sm:$0xff]
      %v223 = vld [vmem:[%s167 + $0x180] sm:$0xff]
      %v224 = vld [vmem:[%s167 + $0x188] sm:$0xff]
      %v225 = vld [vmem:[%s167 + $0x190] sm:$0xff]
      %v226 = vld [vmem:[%s167 + $0x198] sm:$0xff]
      %v227 = vld [vmem:[%s167 + $0x1a0] sm:$0xff]
      %v228 = vld [vmem:[%s167 + $0x1a8] sm:$0xff]
      %v229 = vld [vmem:[%s167 + $0x1b0] sm:$0xff]
      %v230 = vld [vmem:[%s167 + $0x1b8] sm:$0xff]
      %v231 = vld [vmem:[%s167 + $0x1c0] sm:$0xff]
      %v232 = vld [vmem:[%s167 + $0x1c8] sm:$0xff]
      %v233 = vld [vmem:[%s167 + $0x1d0] sm:$0xff]
      %v234 = vld [vmem:[%s167 + $0x1d8] sm:$0xff]
      %v235 = vld [vmem:[%s167 + $0x1e0] sm:$0xff]
      %v236 = vld [vmem:[%s167 + $0x1e8] sm:$0xff]
      %v237 = vld [vmem:[%s167 + $0x1f0] sm:$0xff]
      %v238 = vld [vmem:[%s167 + $0x1f8] sm:$0xff]
      %v239 = vld [vmem:[%s167 + $0x200] sm:$0xff]
      %v240 = vld [vmem:[%s167 + $0x208] sm:$0xff]
      %v241 = vld [vmem:[%s167 + $0x210] sm:$0xff]
      %v242 = vld [vmem:[%s167 + $0x218] sm:$0xff]
      %v243 = vld [vmem:[%s167 + $0x220] sm:$0xff]
      %v244 = vld [vmem:[%s167 + $0x228] sm:$0xff]
      %v245 = vld [vmem:[%s167 + $0x230] sm:$0xff]
      %v246 = vld [vmem:[%s167 + $0x238] sm:$0xff]
      %v247 = vld [vmem:[%s167 + $0x240] sm:$0xff]
      %v248 = vld [vmem:[%s167 + $0x248] sm:$0xff]
      %v249 = vld [vmem:[%s167 + $0x250] sm:$0xff]
      %v250 = vld [vmem:[%s167 + $0x258] sm:$0xff]
      %v251 = vld [vmem:[%s167 + $0x260] sm:$0xff]
      %v252 = vld [vmem:[%s167 + $0x268] sm:$0xff]
      %v253 = vld [vmem:[%s167 + $0x270] sm:$0xff]
      %v254 = vld [vmem:[%s167 + $0x278] sm:$0xff]
      %v255 = vld [vmem:[%s167 + $0x280] sm:$0xff]
      %v256 = vld [vmem:[%s167 + $0x288] sm:$0xff]
      %v257 = vld [vmem:[%s167 + $0x290] sm:$0xff]
      %v258 = vld [vmem:[%s167 + $0x298] sm:$0xff]
      %v259 = vld [vmem:[%s167 + $0x2a0] sm:$0xff]
      %v260 = vld [vmem:[%s167 + $0x2a8] sm:$0xff]
      %v261 = vld [vmem:[%s167 + $0x2b0] sm:$0xff]
      %v262 = vld [vmem:[%s167 + $0x2b8] sm:$0xff]
      %v263 = vld [vmem:[%s167 + $0x2c0] sm:$0xff]
      %v264 = vld [vmem:[%s167 + $0x2c8] sm:$0xff]
      %v265 = vld [vmem:[%s167 + $0x2d0] sm:$0xff]
      %v266 = vld [vmem:[%s167 + $0x2d8] sm:$0xff]
      %v267 = vld [vmem:[%s167 + $0x2e0] sm:$0xff]
      %v268 = vld [vmem:[%s167 + $0x2e8] sm:$0xff]
      %v269 = vld [vmem:[%s167 + $0x2f0] sm:$0xff]
      %v270 = vld [vmem:[%s167 + $0x2f8] sm:$0xff]
      %v271 = vld [vmem:[%s167 + $0x300] sm:$0xff]
      %v272 = vld [vmem:[%s167 + $0x308] sm:$0xff]
      %v273 = vld [vmem:[%s167 + $0x310] sm:$0xff]
      %v274 = vld [vmem:[%s167 + $0x318] sm:$0xff]
      %v275 = vld [vmem:[%s167 + $0x320] sm:$0xff]
      %v276 = vld [vmem:[%s167 + $0x328] sm:$0xff]
      %v277 = vld [vmem:[%s167 + $0x330] sm:$0xff]
      %v278 = vld [vmem:[%s167 + $0x338] sm:$0xff]
      %v279 = vld [vmem:[%s167 + $0x340] sm:$0xff]
      %v280 = vld [vmem:[%s167 + $0x348] sm:$0xff]
      %v281 = vld [vmem:[%s167 + $0x350] sm:$0xff]
      %v282 = vld [vmem:[%s167 + $0x358] sm:$0xff]
      %v283 = vld [vmem:[%s167 + $0x360] sm:$0xff]
      %v284 = vld [vmem:[%s167 + $0x368] sm:$0xff]
      %v285 = vld [vmem:[%s167 + $0x370] sm:$0xff]
      %v286 = vld [vmem:[%s167 + $0x378] sm:$0xff]
      %v287 = vld [vmem:[%s167 + $0x380] sm:$0xff]
      %v288 = vld [vmem:[%s167 + $0x388] sm:$0xff]
      %v289 = vld [vmem:[%s167 + $0x390] sm:$0xff]
      %v290 = vld [vmem:[%s167 + $0x398] sm:$0xff]
      %v291 = vld [vmem:[%s167 + $0x3a0] sm:$0xff]
      %v292 = vld [vmem:[%s167 + $0x3a8] sm:$0xff]
      %v293 = vld [vmem:[%s167 + $0x3b0] sm:$0xff]
      %v294 = vld [vmem:[%s167 + $0x3b8] sm:$0xff]
      %v295 = vld [vmem:[%s167 + $0x3c0] sm:$0xff]
      %v296 = vld [vmem:[%s167 + $0x3c8] sm:$0xff]
      %v297 = vld [vmem:[%s167 + $0x3d0] sm:$0xff]
      %v298 = vld [vmem:[%s167 + $0x3d8] sm:$0xff]
      %v299 = vld [vmem:[%s167 + $0x3e0] sm:$0xff]
      %v300 = vld [vmem:[%s167 + $0x3e8] sm:$0xff]
      %v301 = vld [vmem:[%s167 + $0x3f0] sm:$0xff]
      %v302 = vld [vmem:[%s167 + $0x3f8] sm:$0xff]
      %v303 = vld [vmem:[%s167 + $0x400] sm:$0xff]
      %v304 = vld [vmem:[%s167 + $0x408] sm:$0xff]
      %v305 = vld [vmem:[%s167 + $0x410] sm:$0xff]
      %v306 = vld [vmem:[%s167 + $0x418] sm:$0xff]
      %v307 = vld [vmem:[%s167 + $0x420] sm:$0xff]
      %v308 = vld [vmem:[%s167 + $0x428] sm:$0xff]
      %v309 = vld [vmem:[%s167 + $0x430] sm:$0xff]
      %v310 = vld [vmem:[%s167 + $0x438] sm:$0xff]
      %v311 = vld [vmem:[%s167 + $0x440] sm:$0xff]
      %v312 = vld [vmem:[%s167 + $0x448] sm:$0xff]
      %v313 = vld [vmem:[%s167 + $0x450] sm:$0xff]
      %v314 = vld [vmem:[%s167 + $0x458] sm:$0xff]
      %v315 = vld [vmem:[%s167 + $0x460] sm:$0xff]
      %v316 = vld [vmem:[%s167 + $0x468] sm:$0xff]
      %v317 = vld [vmem:[%s167 + $0x470] sm:$0xff]
      %v318 = vld [vmem:[%s167 + $0x478] sm:$0xff]
      %v319 = vld [vmem:[%s167 + $0x480] sm:$0xff]
      %v320 = vld [vmem:[%s167 + $0x488] sm:$0xff]
      %v321 = vld [vmem:[%s167 + $0x490] sm:$0xff]
      %v322 = vld [vmem:[%s167 + $0x498] sm:$0xff]
      %v323 = vld [vmem:[%s167 + $0x4a0] sm:$0xff]
      %v324 = vld [vmem:[%s167 + $0x4a8] sm:$0xff]
      %v325 = vld [vmem:[%s167 + $0x4b0] sm:$0xff]
      %v326 = vld [vmem:[%s167 + $0x4b8] sm:$0xff]
      %v327 = vld [vmem:[%s167 + $0x4c0] sm:$0xff]
      %v328 = vld [vmem:[%s167 + $0x4c8] sm:$0xff]
      %v329 = vld [vmem:[%s167 + $0x4d0] sm:$0xff]
      %v330 = vld [vmem:[%s167 + $0x4d8] sm:$0xff]
      %v331 = vld [vmem:[%s167 + $0x4e0] sm:$0xff]
      %v332 = vld [vmem:[%s167 + $0x4e8] sm:$0xff]
      %v333 = vld [vmem:[%s167 + $0x4f0] sm:$0xff]
      %v334 = vld [vmem:[%s167 + $0x4f8] sm:$0xff]
      %v335 = vld [vmem:[%s167 + $0x500] sm:$0xff]
      %v336 = vld [vmem:[%s167 + $0x508] sm:$0xff]
      %v337 = vld [vmem:[%s167 + $0x510] sm:$0xff]
      %v338 = vld [vmem:[%s167 + $0x518] sm:$0xff]
      %v339 = vld [vmem:[%s167 + $0x520] sm:$0xff]
      %v340 = vld [vmem:[%s167 + $0x528] sm:$0xff]
      %v341 = vld [vmem:[%s167 + $0x530] sm:$0xff]
      %v342 = vld [vmem:[%s167 + $0x538] sm:$0xff]
      %v343 = vld [vmem:[%s167 + $0x540] sm:$0xff]
      %v344 = vld [vmem:[%s167 + $0x548] sm:$0xff]
      %v345 = vld [vmem:[%s167 + $0x550] sm:$0xff]
      %v346 = vld [vmem:[%s167 + $0x558] sm:$0xff]
      %v347 = vld [vmem:[%s167 + $0x560] sm:$0xff]
      %v348 = vld [vmem:[%s167 + $0x568] sm:$0xff]
      %v349 = vld [vmem:[%s167 + $0x570] sm:$0xff]
      %v350 = vld [vmem:[%s167 + $0x578] sm:$0xff]
      %v351 = vld [vmem:[%s167 + $0x580] sm:$0xff]
      %v352 = vld [vmem:[%s167 + $0x588] sm:$0xff]
      %v353 = vld [vmem:[%s167 + $0x590] sm:$0xff]
      %v354 = vld [vmem:[%s167 + $0x598] sm:$0xff]
      %v355 = vld [vmem:[%s167 + $0x5a0] sm:$0xff]
      %v356 = vld [vmem:[%s167 + $0x5a8] sm:$0xff]
      %v357 = vld [vmem:[%s167 + $0x5b0] sm:$0xff]
      %v358 = vld [vmem:[%s167 + $0x5b8] sm:$0xff]
      %v359 = vld [vmem:[%s167 + $0x5c0] sm:$0xff]
      %v360 = vld [vmem:[%s167 + $0x5c8] sm:$0xff]
      %v361 = vld [vmem:[%s167 + $0x5d0] sm:$0xff]
      %v362 = vld [vmem:[%s167 + $0x5d8] sm:$0xff]
      %v363 = vld [vmem:[%s167 + $0x5e0] sm:$0xff]
      %v364 = vld [vmem:[%s167 + $0x5e8] sm:$0xff]
      %v365 = vld [vmem:[%s167 + $0x5f0] sm:$0xff]
      %v366 = vld [vmem:[%s167 + $0x5f8] sm:$0xff]
      %v367 = vld [vmem:[%s167 + $0x600] sm:$0xff]
      %v368 = vld [vmem:[%s167 + $0x608] sm:$0xff]
      %v369 = vld [vmem:[%s167 + $0x610] sm:$0xff]
      %v370 = vld [vmem:[%s167 + $0x618] sm:$0xff]
      %v371 = vld [vmem:[%s167 + $0x620] sm:$0xff]
      %v372 = vld [vmem:[%s167 + $0x628] sm:$0xff]
      %v373 = vld [vmem:[%s167 + $0x630] sm:$0xff]
      %v374 = vld [vmem:[%s167 + $0x638] sm:$0xff]
      %v375 = vld [vmem:[%s167 + $0x640] sm:$0xff]
      %v376 = vld [vmem:[%s167 + $0x648] sm:$0xff]
      %v377 = vld [vmem:[%s167 + $0x650] sm:$0xff]
      %v378 = vld [vmem:[%s167 + $0x658] sm:$0xff]
      %v379 = vld [vmem:[%s167 + $0x660] sm:$0xff]
      %v380 = vld [vmem:[%s167 + $0x668] sm:$0xff]
      %v381 = vld [vmem:[%s167 + $0x670] sm:$0xff]
      %v382 = vld [vmem:[%s167 + $0x678] sm:$0xff]
      %v383 = vld [vmem:[%s167 + $0x680] sm:$0xff]
      %v384 = vld [vmem:[%s167 + $0x688] sm:$0xff]
      %v385 = vld [vmem:[%s167 + $0x690] sm:$0xff]
      %v386 = vld [vmem:[%s167 + $0x698] sm:$0xff]
      %v387 = vld [vmem:[%s167 + $0x6a0] sm:$0xff]
      %v388 = vld [vmem:[%s167 + $0x6a8] sm:$0xff]
      %v389 = vld [vmem:[%s167 + $0x6b0] sm:$0xff]
      %v390 = vld [vmem:[%s167 + $0x6b8] sm:$0xff]
      %v391 = vld [vmem:[%s167 + $0x6c0] sm:$0xff]
      %v392 = vld [vmem:[%s167 + $0x6c8] sm:$0xff]
      %v393 = vld [vmem:[%s167 + $0x6d0] sm:$0xff]
      %v394 = vld [vmem:[%s167 + $0x6d8] sm:$0xff]
      %v395 = vld [vmem:[%s167 + $0x6e0] sm:$0xff]
      %v396 = vld [vmem:[%s167 + $0x6e8] sm:$0xff]
      %v397 = vld [vmem:[%s167 + $0x6f0] sm:$0xff]
      %v398 = vld [vmem:[%s167 + $0x6f8] sm:$0xff]
      %v399 = vld [vmem:[%s167 + $0x700] sm:$0xff]
      %v400 = vld [vmem:[%s167 + $0x708] sm:$0xff]
      %v401 = vld [vmem:[%s167 + $0x710] sm:$0xff]
      %v402 = vld [vmem:[%s167 + $0x718] sm:$0xff]
      %v403 = vld [vmem:[%s167 + $0x720] sm:$0xff]
      %v404 = vld [vmem:[%s167 + $0x728] sm:$0xff]
      %v405 = vld [vmem:[%s167 + $0x730] sm:$0xff]
      %v406 = vld [vmem:[%s167 + $0x738] sm:$0xff]
      %v407 = vld [vmem:[%s167 + $0x740] sm:$0xff]
      %v408 = vld [vmem:[%s167 + $0x748] sm:$0xff]
      %v409 = vld [vmem:[%s167 + $0x750] sm:$0xff]
      %v410 = vld [vmem:[%s167 + $0x758] sm:$0xff]
      %v411 = vld [vmem:[%s167 + $0x760] sm:$0xff]
      %v412 = vld [vmem:[%s167 + $0x768] sm:$0xff]
      %v413 = vld [vmem:[%s167 + $0x770] sm:$0xff]
      %v414 = vld [vmem:[%s167 + $0x778] sm:$0xff]
      %v415 = vld [vmem:[%s167 + $0x780] sm:$0xff]
      %v416 = vld [vmem:[%s167 + $0x788] sm:$0xff]
      %v417 = vld [vmem:[%s167 + $0x790] sm:$0xff]
      %v418 = vld [vmem:[%s167 + $0x798] sm:$0xff]
      %v419 = vld [vmem:[%s167 + $0x7a0] sm:$0xff]
      %v420 = vld [vmem:[%s167 + $0x7a8] sm:$0xff]
      %v421 = vld [vmem:[%s167 + $0x7b0] sm:$0xff]
      %v422 = vld [vmem:[%s167 + $0x7b8] sm:$0xff]
      %v423 = vld [vmem:[%s167 + $0x7c0] sm:$0xff]
      %v424 = vld [vmem:[%s167 + $0x7c8] sm:$0xff]
      %v425 = vld [vmem:[%s167 + $0x7d0] sm:$0xff]
      %v426 = vld [vmem:[%s167 + $0x7d8] sm:$0xff]
      %v427 = vld [vmem:[%s167 + $0x7e0] sm:$0xff]
      %v428 = vld [vmem:[%s167 + $0x7e8] sm:$0xff]
      %v429 = vld [vmem:[%s167 + $0x7f0] sm:$0xff]
      %v430 = vld [vmem:[%s167 + $0x7f8] sm:$0xff]
      %v431 = vld [vmem:[%s1] sm:$0x1]
      %v433 = vperm.slane %v431, 0
      %v435 = vmul.f32 %v175, %v433
      %v436 = vmul.f32 %v176, %v433
      %v437 = vmul.f32 %v177, %v433
      %v438 = vmul.f32 %v178, %v433
      %v439 = vmul.f32 %v179, %v433
      %v440 = vmul.f32 %v180, %v433
      %v441 = vmul.f32 %v181, %v433
      %v442 = vmul.f32 %v182, %v433
      %v443 = vmul.f32 %v183, %v433
      %v444 = vmul.f32 %v184, %v433
      %v445 = vmul.f32 %v185, %v433
      %v446 = vmul.f32 %v186, %v433
      %v447 = vmul.f32 %v187, %v433
      %v448 = vmul.f32 %v188, %v433
      %v449 = vmul.f32 %v189, %v433
      %v450 = vmul.f32 %v190, %v433
      %v451 = vmul.f32 %v191, %v433
      %v452 = vmul.f32 %v192, %v433
      %v453 = vmul.f32 %v193, %v433
      %v454 = vmul.f32 %v194, %v433
      %v455 = vmul.f32 %v195, %v433
      %v456 = vmul.f32 %v196, %v433
      %v457 = vmul.f32 %v197, %v433
      %v458 = vmul.f32 %v198, %v433
      %v459 = vmul.f32 %v199, %v433
      %v460 = vmul.f32 %v200, %v433
      %v461 = vmul.f32 %v201, %v433
      %v462 = vmul.f32 %v202, %v433
      %v463 = vmul.f32 %v203, %v433
      %v464 = vmul.f32 %v204, %v433
      %v465 = vmul.f32 %v205, %v433
      %v466 = vmul.f32 %v206, %v433
      %v467 = vmul.f32 %v207, %v433
      %v468 = vmul.f32 %v208, %v433
      %v469 = vmul.f32 %v209, %v433
      %v470 = vmul.f32 %v210, %v433
      %v471 = vmul.f32 %v211, %v433
      %v472 = vmul.f32 %v212, %v433
      %v473 = vmul.f32 %v213, %v433
      %v474 = vmul.f32 %v214, %v433
      %v475 = vmul.f32 %v215, %v433
      %v476 = vmul.f32 %v216, %v433
      %v477 = vmul.f32 %v217, %v433
      %v478 = vmul.f32 %v218, %v433
      %v479 = vmul.f32 %v219, %v433
      %v480 = vmul.f32 %v220, %v433
      %v481 = vmul.f32 %v221, %v433
      %v482 = vmul.f32 %v222, %v433
      %v483 = vmul.f32 %v223, %v433
      %v484 = vmul.f32 %v224, %v433
      %v485 = vmul.f32 %v225, %v433
      %v486 = vmul.f32 %v226, %v433
      %v487 = vmul.f32 %v227, %v433
      %v488 = vmul.f32 %v228, %v433
      %v489 = vmul.f32 %v229, %v433
      %v490 = vmul.f32 %v230, %v433
      %v491 = vmul.f32 %v231, %v433
      %v492 = vmul.f32 %v232, %v433
      %v493 = vmul.f32 %v233, %v433
      %v494 = vmul.f32 %v234, %v433
      %v495 = vmul.f32 %v235, %v433
      %v496 = vmul.f32 %v236, %v433
      %v497 = vmul.f32 %v237, %v433
      %v498 = vmul.f32 %v238, %v433
      %v499 = vmul.f32 %v239, %v433
      %v500 = vmul.f32 %v240, %v433
      %v501 = vmul.f32 %v241, %v433
      %v502 = vmul.f32 %v242, %v433
      %v503 = vmul.f32 %v243, %v433
      %v504 = vmul.f32 %v244, %v433
      %v505 = vmul.f32 %v245, %v433
      %v506 = vmul.f32 %v246, %v433
      %v507 = vmul.f32 %v247, %v433
      %v508 = vmul.f32 %v248, %v433
      %v509 = vmul.f32 %v249, %v433
      %v510 = vmul.f32 %v250, %v433
      %v511 = vmul.f32 %v251, %v433
      %v512 = vmul.f32 %v252, %v433
      %v513 = vmul.f32 %v253, %v433
      %v514 = vmul.f32 %v254, %v433
      %v515 = vmul.f32 %v255, %v433
      %v516 = vmul.f32 %v256, %v433
      %v517 = vmul.f32 %v257, %v433
      %v518 = vmul.f32 %v258, %v433
      %v519 = vmul.f32 %v259, %v433
      %v520 = vmul.f32 %v260, %v433
      %v521 = vmul.f32 %v261, %v433
      %v522 = vmul.f32 %v262, %v433
      %v523 = vmul.f32 %v263, %v433
      %v524 = vmul.f32 %v264, %v433
      %v525 = vmul.f32 %v265, %v433
      %v526 = vmul.f32 %v266, %v433
      %v527 = vmul.f32 %v267, %v433
      %v528 = vmul.f32 %v268, %v433
      %v529 = vmul.f32 %v269, %v433
      %v530 = vmul.f32 %v270, %v433
      %v531 = vmul.f32 %v271, %v433
      %v532 = vmul.f32 %v272, %v433
      %v533 = vmul.f32 %v273, %v433
      %v534 = vmul.f32 %v274, %v433
      %v535 = vmul.f32 %v275, %v433
      %v536 = vmul.f32 %v276, %v433
      %v537 = vmul.f32 %v277, %v433
      %v538 = vmul.f32 %v278, %v433
      %v539 = vmul.f32 %v279, %v433
      %v540 = vmul.f32 %v280, %v433
      %v541 = vmul.f32 %v281, %v433
      %v542 = vmul.f32 %v282, %v433
      %v543 = vmul.f32 %v283, %v433
      %v544 = vmul.f32 %v284, %v433
      %v545 = vmul.f32 %v285, %v433
      %v546 = vmul.f32 %v286, %v433
      %v547 = vmul.f32 %v287, %v433
      %v548 = vmul.f32 %v288, %v433
      %v549 = vmul.f32 %v289, %v433
      %v550 = vmul.f32 %v290, %v433
      %v551 = vmul.f32 %v291, %v433
      %v552 = vmul.f32 %v292, %v433
      %v553 = vmul.f32 %v293, %v433
      %v554 = vmul.f32 %v294, %v433
      %v555 = vmul.f32 %v295, %v433
      %v556 = vmul.f32 %v296, %v433
      %v557 = vmul.f32 %v297, %v433
      %v558 = vmul.f32 %v298, %v433
      %v559 = vmul.f32 %v299, %v433
      %v560 = vmul.f32 %v300, %v433
      %v561 = vmul.f32 %v301, %v433
      %v562 = vmul.f32 %v302, %v433
      %v563 = vmul.f32 %v303, %v433
      %v564 = vmul.f32 %v304, %v433
      %v565 = vmul.f32 %v305, %v433
      %v566 = vmul.f32 %v306, %v433
      %v567 = vmul.f32 %v307, %v433
      %v568 = vmul.f32 %v308, %v433
      %v569 = vmul.f32 %v309, %v433
      %v570 = vmul.f32 %v310, %v433
      %v571 = vmul.f32 %v311, %v433
      %v572 = vmul.f32 %v312, %v433
      %v573 = vmul.f32 %v313, %v433
      %v574 = vmul.f32 %v314, %v433
      %v575 = vmul.f32 %v315, %v433
      %v576 = vmul.f32 %v316, %v433
      %v577 = vmul.f32 %v317, %v433
      %v578 = vmul.f32 %v318, %v433
      %v579 = vmul.f32 %v319, %v433
      %v580 = vmul.f32 %v320, %v433
      %v581 = vmul.f32 %v321, %v433
      %v582 = vmul.f32 %v322, %v433
      %v583 = vmul.f32 %v323, %v433
      %v584 = vmul.f32 %v324, %v433
      %v585 = vmul.f32 %v325, %v433
      %v586 = vmul.f32 %v326, %v433
      %v587 = vmul.f32 %v327, %v433
      %v588 = vmul.f32 %v328, %v433
      %v589 = vmul.f32 %v329, %v433
      %v590 = vmul.f32 %v330, %v433
      %v591 = vmul.f32 %v331, %v433
      %v592 = vmul.f32 %v332, %v433
      %v593 = vmul.f32 %v333, %v433
      %v594 = vmul.f32 %v334, %v433
      %v595 = vmul.f32 %v335, %v433
      %v596 = vmul.f32 %v336, %v433
      %v597 = vmul.f32 %v337, %v433
      %v598 = vmul.f32 %v338, %v433
      %v599 = vmul.f32 %v339, %v433
      %v600 = vmul.f32 %v340, %v433
      %v601 = vmul.f32 %v341, %v433
      %v602 = vmul.f32 %v342, %v433
      %v603 = vmul.f32 %v343, %v433
      %v604 = vmul.f32 %v344, %v433
      %v605 = vmul.f32 %v345, %v433
      %v606 = vmul.f32 %v346, %v433
      %v607 = vmul.f32 %v347, %v433
      %v608 = vmul.f32 %v348, %v433
      %v609 = vmul.f32 %v349, %v433
      %v610 = vmul.f32 %v350, %v433
      %v611 = vmul.f32 %v351, %v433
      %v612 = vmul.f32 %v352, %v433
      %v613 = vmul.f32 %v353, %v433
      %v614 = vmul.f32 %v354, %v433
      %v615 = vmul.f32 %v355, %v433
      %v616 = vmul.f32 %v356, %v433
      %v617 = vmul.f32 %v357, %v433
      %v618 = vmul.f32 %v358, %v433
      %v619 = vmul.f32 %v359, %v433
      %v620 = vmul.f32 %v360, %v433
      %v621 = vmul.f32 %v361, %v433
      %v622 = vmul.f32 %v362, %v433
      %v623 = vmul.f32 %v363, %v433
      %v624 = vmul.f32 %v364, %v433
      %v625 = vmul.f32 %v365, %v433
      %v626 = vmul.f32 %v366, %v433
      %v627 = vmul.f32 %v367, %v433
      %v628 = vmul.f32 %v368, %v433
      %v629 = vmul.f32 %v369, %v433
      %v630 = vmul.f32 %v370, %v433
      %v631 = vmul.f32 %v371, %v433
      %v632 = vmul.f32 %v372, %v433
      %v633 = vmul.f32 %v373, %v433
      %v634 = vmul.f32 %v374, %v433
      %v635 = vmul.f32 %v375, %v433
      %v636 = vmul.f32 %v376, %v433
      %v637 = vmul.f32 %v377, %v433
      %v638 = vmul.f32 %v378, %v433
      %v639 = vmul.f32 %v379, %v433
      %v640 = vmul.f32 %v380, %v433
      %v641 = vmul.f32 %v381, %v433
      %v642 = vmul.f32 %v382, %v433
      %v643 = vmul.f32 %v383, %v433
      %v644 = vmul.f32 %v384, %v433
      %v645 = vmul.f32 %v385, %v433
      %v646 = vmul.f32 %v386, %v433
      %v647 = vmul.f32 %v387, %v433
      %v648 = vmul.f32 %v388, %v433
      %v649 = vmul.f32 %v389, %v433
      %v650 = vmul.f32 %v390, %v433
      %v651 = vmul.f32 %v391, %v433
      %v652 = vmul.f32 %v392, %v433
      %v653 = vmul.f32 %v393, %v433
      %v654 = vmul.f32 %v394, %v433
      %v655 = vmul.f32 %v395, %v433
      %v656 = vmul.f32 %v396, %v433
      %v657 = vmul.f32 %v397, %v433
      %v658 = vmul.f32 %v398, %v433
      %v659 = vmul.f32 %v399, %v433
      %v660 = vmul.f32 %v400, %v433
      %v661 = vmul.f32 %v401, %v433
      %v662 = vmul.f32 %v402, %v433
      %v663 = vmul.f32 %v403, %v433
      %v664 = vmul.f32 %v404, %v433
      %v665 = vmul.f32 %v405, %v433
      %v666 = vmul.f32 %v406, %v433
      %v667 = vmul.f32 %v407, %v433
      %v668 = vmul.f32 %v408, %v433
      %v669 = vmul.f32 %v409, %v433
      %v670 = vmul.f32 %v410, %v433
      %v671 = vmul.f32 %v411, %v433
      %v672 = vmul.f32 %v412, %v433
      %v673 = vmul.f32 %v413, %v433
      %v674 = vmul.f32 %v414, %v433
      %v675 = vmul.f32 %v415, %v433
      %v676 = vmul.f32 %v416, %v433
      %v677 = vmul.f32 %v417, %v433
      %v678 = vmul.f32 %v418, %v433
      %v679 = vmul.f32 %v419, %v433
      %v680 = vmul.f32 %v420, %v433
      %v681 = vmul.f32 %v421, %v433
      %v682 = vmul.f32 %v422, %v433
      %v683 = vmul.f32 %v423, %v433
      %v684 = vmul.f32 %v424, %v433
      %v685 = vmul.f32 %v425, %v433
      %v686 = vmul.f32 %v426, %v433
      %v687 = vmul.f32 %v427, %v433
      %v688 = vmul.f32 %v428, %v433
      %v689 = vmul.f32 %v429, %v433
      %v690 = vmul.f32 %v430, %v433
      %vm691 = vcmask 105472
      %v692 = vsel %vm691, %v435, 0.0
      %693 = vadd.xlane.f32.xlu0 %v692
      %v694 = vpop.xlane.xlu0 %693
      %v695 = vsel %vm691, %v436, 0.0
      %696 = vadd.xlane.f32.xlu0 %v695
      %v697 = vpop.xlane.xlu0 %696
      %v698 = vsel %vm691, %v437, 0.0
      %699 = vadd.xlane.f32.xlu0 %v698
      %v700 = vpop.xlane.xlu0 %699
      %v701 = vsel %vm691, %v438, 0.0
      %702 = vadd.xlane.f32.xlu0 %v701
      %v703 = vpop.xlane.xlu0 %702
      %v704 = vsel %vm691, %v439, 0.0
      %705 = vadd.xlane.f32.xlu0 %v704
      %v706 = vpop.xlane.xlu0 %705
      %v707 = vsel %vm691, %v440, 0.0
      %708 = vadd.xlane.f32.xlu0 %v707
      %v709 = vpop.xlane.xlu0 %708
      %v710 = vsel %vm691, %v441, 0.0
      %711 = vadd.xlane.f32.xlu0 %v710
      %v712 = vpop.xlane.xlu0 %711
      %v713 = vsel %vm691, %v442, 0.0
      %714 = vadd.xlane.f32.xlu0 %v713
      %v715 = vpop.xlane.xlu0 %714
      %v716 = vsel %vm691, %v443, 0.0
      %717 = vadd.xlane.f32.xlu0 %v716
      %v718 = vpop.xlane.xlu0 %717
      %v719 = vsel %vm691, %v444, 0.0
      %720 = vadd.xlane.f32.xlu0 %v719
      %v721 = vpop.xlane.xlu0 %720
      %v722 = vsel %vm691, %v445, 0.0
      %723 = vadd.xlane.f32.xlu0 %v722
      %v724 = vpop.xlane.xlu0 %723
      %v725 = vsel %vm691, %v446, 0.0
      %726 = vadd.xlane.f32.xlu0 %v725
      %v727 = vpop.xlane.xlu0 %726
      %v728 = vsel %vm691, %v447, 0.0
      %729 = vadd.xlane.f32.xlu0 %v728
      %v730 = vpop.xlane.xlu0 %729
      %v731 = vsel %vm691, %v448, 0.0
      %732 = vadd.xlane.f32.xlu0 %v731
      %v733 = vpop.xlane.xlu0 %732
      %v734 = vsel %vm691, %v449, 0.0
      %735 = vadd.xlane.f32.xlu0 %v734
      %v736 = vpop.xlane.xlu0 %735
      %v737 = vsel %vm691, %v450, 0.0
      %738 = vadd.xlane.f32.xlu0 %v737
      %v739 = vpop.xlane.xlu0 %738
      %v740 = vsel %vm691, %v451, 0.0
      %741 = vadd.xlane.f32.xlu0 %v740
      %v742 = vpop.xlane.xlu0 %741
      %v743 = vsel %vm691, %v452, 0.0
      %744 = vadd.xlane.f32.xlu0 %v743
      %v745 = vpop.xlane.xlu0 %744
      %v746 = vsel %vm691, %v453, 0.0
      %747 = vadd.xlane.f32.xlu0 %v746
      %v748 = vpop.xlane.xlu0 %747
      %v749 = vsel %vm691, %v454, 0.0
      %750 = vadd.xlane.f32.xlu0 %v749
      %v751 = vpop.xlane.xlu0 %750
      %v752 = vsel %vm691, %v455, 0.0
      %753 = vadd.xlane.f32.xlu0 %v752
      %v754 = vpop.xlane.xlu0 %753
      %v755 = vsel %vm691, %v456, 0.0
      %756 = vadd.xlane.f32.xlu0 %v755
      %v757 = vpop.xlane.xlu0 %756
      %v758 = vsel %vm691, %v457, 0.0
      %759 = vadd.xlane.f32.xlu0 %v758
      %v760 = vpop.xlane.xlu0 %759
      %v761 = vsel %vm691, %v458, 0.0
      %762 = vadd.xlane.f32.xlu0 %v761
      %v763 = vpop.xlane.xlu0 %762
      %v764 = vsel %vm691, %v459, 0.0
      %765 = vadd.xlane.f32.xlu0 %v764
      %v766 = vpop.xlane.xlu0 %765
      %v767 = vsel %vm691, %v460, 0.0
      %768 = vadd.xlane.f32.xlu0 %v767
      %v769 = vpop.xlane.xlu0 %768
      %v770 = vsel %vm691, %v461, 0.0
      %771 = vadd.xlane.f32.xlu0 %v770
      %v772 = vpop.xlane.xlu0 %771
      %v773 = vsel %vm691, %v462, 0.0
      %774 = vadd.xlane.f32.xlu0 %v773
      %v775 = vpop.xlane.xlu0 %774
      %v776 = vsel %vm691, %v463, 0.0
      %777 = vadd.xlane.f32.xlu0 %v776
      %v778 = vpop.xlane.xlu0 %777
      %v779 = vsel %vm691, %v464, 0.0
      %780 = vadd.xlane.f32.xlu0 %v779
      %v781 = vpop.xlane.xlu0 %780
      %v782 = vsel %vm691, %v465, 0.0
      %783 = vadd.xlane.f32.xlu0 %v782
      %v784 = vpop.xlane.xlu0 %783
      %v785 = vsel %vm691, %v466, 0.0
      %786 = vadd.xlane.f32.xlu0 %v785
      %v787 = vpop.xlane.xlu0 %786
      %v788 = vsel %vm691, %v467, 0.0
      %789 = vadd.xlane.f32.xlu0 %v788
      %v790 = vpop.xlane.xlu0 %789
      %v791 = vsel %vm691, %v468, 0.0
      %792 = vadd.xlane.f32.xlu0 %v791
      %v793 = vpop.xlane.xlu0 %792
      %v794 = vsel %vm691, %v469, 0.0
      %795 = vadd.xlane.f32.xlu0 %v794
      %v796 = vpop.xlane.xlu0 %795
      %v797 = vsel %vm691, %v470, 0.0
      %798 = vadd.xlane.f32.xlu0 %v797
      %v799 = vpop.xlane.xlu0 %798
      %v800 = vsel %vm691, %v471, 0.0
      %801 = vadd.xlane.f32.xlu0 %v800
      %v802 = vpop.xlane.xlu0 %801
      %v803 = vsel %vm691, %v472, 0.0
      %804 = vadd.xlane.f32.xlu0 %v803
      %v805 = vpop.xlane.xlu0 %804
      %v806 = vsel %vm691, %v473, 0.0
      %807 = vadd.xlane.f32.xlu0 %v806
      %v808 = vpop.xlane.xlu0 %807
      %v809 = vsel %vm691, %v474, 0.0
      %810 = vadd.xlane.f32.xlu0 %v809
      %v811 = vpop.xlane.xlu0 %810
      %v812 = vsel %vm691, %v475, 0.0
      %813 = vadd.xlane.f32.xlu0 %v812
      %v814 = vpop.xlane.xlu0 %813
      %v815 = vsel %vm691, %v476, 0.0
      %816 = vadd.xlane.f32.xlu0 %v815
      %v817 = vpop.xlane.xlu0 %816
      %v818 = vsel %vm691, %v477, 0.0
      %819 = vadd.xlane.f32.xlu0 %v818
      %v820 = vpop.xlane.xlu0 %819
      %v821 = vsel %vm691, %v478, 0.0
      %822 = vadd.xlane.f32.xlu0 %v821
      %v823 = vpop.xlane.xlu0 %822
      %v824 = vsel %vm691, %v479, 0.0
      %825 = vadd.xlane.f32.xlu0 %v824
      %v826 = vpop.xlane.xlu0 %825
      %v827 = vsel %vm691, %v480, 0.0
      %828 = vadd.xlane.f32.xlu0 %v827
      %v829 = vpop.xlane.xlu0 %828
      %v830 = vsel %vm691, %v481, 0.0
      %831 = vadd.xlane.f32.xlu0 %v830
      %v832 = vpop.xlane.xlu0 %831
      %v833 = vsel %vm691, %v482, 0.0
      %834 = vadd.xlane.f32.xlu0 %v833
      %v835 = vpop.xlane.xlu0 %834
      %v836 = vsel %vm691, %v483, 0.0
      %837 = vadd.xlane.f32.xlu0 %v836
      %v838 = vpop.xlane.xlu0 %837
      %v839 = vsel %vm691, %v484, 0.0
      %840 = vadd.xlane.f32.xlu0 %v839
      %v841 = vpop.xlane.xlu0 %840
      %v842 = vsel %vm691, %v485, 0.0
      %843 = vadd.xlane.f32.xlu0 %v842
      %v844 = vpop.xlane.xlu0 %843
      %v845 = vsel %vm691, %v486, 0.0
      %846 = vadd.xlane.f32.xlu0 %v845
      %v847 = vpop.xlane.xlu0 %846
      %v848 = vsel %vm691, %v487, 0.0
      %849 = vadd.xlane.f32.xlu0 %v848
      %v850 = vpop.xlane.xlu0 %849
      %v851 = vsel %vm691, %v488, 0.0
      %852 = vadd.xlane.f32.xlu0 %v851
      %v853 = vpop.xlane.xlu0 %852
      %v854 = vsel %vm691, %v489, 0.0
      %855 = vadd.xlane.f32.xlu0 %v854
      %v856 = vpop.xlane.xlu0 %855
      %v857 = vsel %vm691, %v490, 0.0
      %858 = vadd.xlane.f32.xlu0 %v857
      %v859 = vpop.xlane.xlu0 %858
      %v860 = vsel %vm691, %v491, 0.0
      %861 = vadd.xlane.f32.xlu0 %v860
      %v862 = vpop.xlane.xlu0 %861
      %v863 = vsel %vm691, %v492, 0.0
      %864 = vadd.xlane.f32.xlu0 %v863
      %v865 = vpop.xlane.xlu0 %864
      %v866 = vsel %vm691, %v493, 0.0
      %867 = vadd.xlane.f32.xlu0 %v866
      %v868 = vpop.xlane.xlu0 %867
      %v869 = vsel %vm691, %v494, 0.0
      %870 = vadd.xlane.f32.xlu0 %v869
      %v871 = vpop.xlane.xlu0 %870
      %v872 = vsel %vm691, %v495, 0.0
      %873 = vadd.xlane.f32.xlu0 %v872
      %v874 = vpop.xlane.xlu0 %873
      %v875 = vsel %vm691, %v496, 0.0
      %876 = vadd.xlane.f32.xlu0 %v875
      %v877 = vpop.xlane.xlu0 %876
      %v878 = vsel %vm691, %v497, 0.0
      %879 = vadd.xlane.f32.xlu0 %v878
      %v880 = vpop.xlane.xlu0 %879
      %v881 = vsel %vm691, %v498, 0.0
      %882 = vadd.xlane.f32.xlu0 %v881
      %v883 = vpop.xlane.xlu0 %882
      %v884 = vsel %vm691, %v499, 0.0
      %885 = vadd.xlane.f32.xlu0 %v884
      %v886 = vpop.xlane.xlu0 %885
      %v887 = vsel %vm691, %v500, 0.0
      %888 = vadd.xlane.f32.xlu0 %v887
      %v889 = vpop.xlane.xlu0 %888
      %v890 = vsel %vm691, %v501, 0.0
      %891 = vadd.xlane.f32.xlu0 %v890
      %v892 = vpop.xlane.xlu0 %891
      %v893 = vsel %vm691, %v502, 0.0
      %894 = vadd.xlane.f32.xlu0 %v893
      %v895 = vpop.xlane.xlu0 %894
      %v896 = vsel %vm691, %v503, 0.0
      %897 = vadd.xlane.f32.xlu0 %v896
      %v898 = vpop.xlane.xlu0 %897
      %v899 = vsel %vm691, %v504, 0.0
      %900 = vadd.xlane.f32.xlu0 %v899
      %v901 = vpop.xlane.xlu0 %900
      %v902 = vsel %vm691, %v505, 0.0
      %903 = vadd.xlane.f32.xlu0 %v902
      %v904 = vpop.xlane.xlu0 %903
      %v905 = vsel %vm691, %v506, 0.0
      %906 = vadd.xlane.f32.xlu0 %v905
      %v907 = vpop.xlane.xlu0 %906
      %v908 = vsel %vm691, %v507, 0.0
      %909 = vadd.xlane.f32.xlu0 %v908
      %v910 = vpop.xlane.xlu0 %909
      %v911 = vsel %vm691, %v508, 0.0
      %912 = vadd.xlane.f32.xlu0 %v911
      %v913 = vpop.xlane.xlu0 %912
      %v914 = vsel %vm691, %v509, 0.0
      %915 = vadd.xlane.f32.xlu0 %v914
      %v916 = vpop.xlane.xlu0 %915
      %v917 = vsel %vm691, %v510, 0.0
      %918 = vadd.xlane.f32.xlu0 %v917
      %v919 = vpop.xlane.xlu0 %918
      %v920 = vsel %vm691, %v511, 0.0
      %921 = vadd.xlane.f32.xlu0 %v920
      %v922 = vpop.xlane.xlu0 %921
      %v923 = vsel %vm691, %v512, 0.0
      %924 = vadd.xlane.f32.xlu0 %v923
      %v925 = vpop.xlane.xlu0 %924
      %v926 = vsel %vm691, %v513, 0.0
      %927 = vadd.xlane.f32.xlu0 %v926
      %v928 = vpop.xlane.xlu0 %927
      %v929 = vsel %vm691, %v514, 0.0
      %930 = vadd.xlane.f32.xlu0 %v929
      %v931 = vpop.xlane.xlu0 %930
      %v932 = vsel %vm691, %v515, 0.0
      %933 = vadd.xlane.f32.xlu0 %v932
      %v934 = vpop.xlane.xlu0 %933
      %v935 = vsel %vm691, %v516, 0.0
      %936 = vadd.xlane.f32.xlu0 %v935
      %v937 = vpop.xlane.xlu0 %936
      %v938 = vsel %vm691, %v517, 0.0
      %939 = vadd.xlane.f32.xlu0 %v938
      %v940 = vpop.xlane.xlu0 %939
      %v941 = vsel %vm691, %v518, 0.0
      %942 = vadd.xlane.f32.xlu0 %v941
      %v943 = vpop.xlane.xlu0 %942
      %v944 = vsel %vm691, %v519, 0.0
      %945 = vadd.xlane.f32.xlu0 %v944
      %v946 = vpop.xlane.xlu0 %945
      %v947 = vsel %vm691, %v520, 0.0
      %948 = vadd.xlane.f32.xlu0 %v947
      %v949 = vpop.xlane.xlu0 %948
      %v950 = vsel %vm691, %v521, 0.0
      %951 = vadd.xlane.f32.xlu0 %v950
      %v952 = vpop.xlane.xlu0 %951
      %v953 = vsel %vm691, %v522, 0.0
      %954 = vadd.xlane.f32.xlu0 %v953
      %v955 = vpop.xlane.xlu0 %954
      %v956 = vsel %vm691, %v523, 0.0
      %957 = vadd.xlane.f32.xlu0 %v956
      %v958 = vpop.xlane.xlu0 %957
      %v959 = vsel %vm691, %v524, 0.0
      %960 = vadd.xlane.f32.xlu0 %v959
      %v961 = vpop.xlane.xlu0 %960
      %v962 = vsel %vm691, %v525, 0.0
      %963 = vadd.xlane.f32.xlu0 %v962
      %v964 = vpop.xlane.xlu0 %963
      %v965 = vsel %vm691, %v526, 0.0
      %966 = vadd.xlane.f32.xlu0 %v965
      %v967 = vpop.xlane.xlu0 %966
      %v968 = vsel %vm691, %v527, 0.0
      %969 = vadd.xlane.f32.xlu0 %v968
      %v970 = vpop.xlane.xlu0 %969
      %v971 = vsel %vm691, %v528, 0.0
      %972 = vadd.xlane.f32.xlu0 %v971
      %v973 = vpop.xlane.xlu0 %972
      %v974 = vsel %vm691, %v529, 0.0
      %975 = vadd.xlane.f32.xlu0 %v974
      %v976 = vpop.xlane.xlu0 %975
      %v977 = vsel %vm691, %v530, 0.0
      %978 = vadd.xlane.f32.xlu0 %v977
      %v979 = vpop.xlane.xlu0 %978
      %v980 = vsel %vm691, %v531, 0.0
      %981 = vadd.xlane.f32.xlu0 %v980
      %v982 = vpop.xlane.xlu0 %981
      %v983 = vsel %vm691, %v532, 0.0
      %984 = vadd.xlane.f32.xlu0 %v983
      %v985 = vpop.xlane.xlu0 %984
      %v986 = vsel %vm691, %v533, 0.0
      %987 = vadd.xlane.f32.xlu0 %v986
      %v988 = vpop.xlane.xlu0 %987
      %v989 = vsel %vm691, %v534, 0.0
      %990 = vadd.xlane.f32.xlu0 %v989
      %v991 = vpop.xlane.xlu0 %990
      %v992 = vsel %vm691, %v535, 0.0
      %993 = vadd.xlane.f32.xlu0 %v992
      %v994 = vpop.xlane.xlu0 %993
      %v995 = vsel %vm691, %v536, 0.0
      %996 = vadd.xlane.f32.xlu0 %v995
      %v997 = vpop.xlane.xlu0 %996
      %v998 = vsel %vm691, %v537, 0.0
      %999 = vadd.xlane.f32.xlu0 %v998
      %v1000 = vpop.xlane.xlu0 %999
      %v1001 = vsel %vm691, %v538, 0.0
      %1002 = vadd.xlane.f32.xlu0 %v1001
      %v1003 = vpop.xlane.xlu0 %1002
      %v1004 = vsel %vm691, %v539, 0.0
      %1005 = vadd.xlane.f32.xlu0 %v1004
      %v1006 = vpop.xlane.xlu0 %1005
      %v1007 = vsel %vm691, %v540, 0.0
      %1008 = vadd.xlane.f32.xlu0 %v1007
      %v1009 = vpop.xlane.xlu0 %1008
      %v1010 = vsel %vm691, %v541, 0.0
      %1011 = vadd.xlane.f32.xlu0 %v1010
      %v1012 = vpop.xlane.xlu0 %1011
      %v1013 = vsel %vm691, %v542, 0.0
      %1014 = vadd.xlane.f32.xlu0 %v1013
      %v1015 = vpop.xlane.xlu0 %1014
      %v1016 = vsel %vm691, %v543, 0.0
      %1017 = vadd.xlane.f32.xlu0 %v1016
      %v1018 = vpop.xlane.xlu0 %1017
      %v1019 = vsel %vm691, %v544, 0.0
      %1020 = vadd.xlane.f32.xlu0 %v1019
      %v1021 = vpop.xlane.xlu0 %1020
      %v1022 = vsel %vm691, %v545, 0.0
      %1023 = vadd.xlane.f32.xlu0 %v1022
      %v1024 = vpop.xlane.xlu0 %1023
      %v1025 = vsel %vm691, %v546, 0.0
      %1026 = vadd.xlane.f32.xlu0 %v1025
      %v1027 = vpop.xlane.xlu0 %1026
      %v1028 = vsel %vm691, %v547, 0.0
      %1029 = vadd.xlane.f32.xlu0 %v1028
      %v1030 = vpop.xlane.xlu0 %1029
      %v1031 = vsel %vm691, %v548, 0.0
      %1032 = vadd.xlane.f32.xlu0 %v1031
      %v1033 = vpop.xlane.xlu0 %1032
      %v1034 = vsel %vm691, %v549, 0.0
      %1035 = vadd.xlane.f32.xlu0 %v1034
      %v1036 = vpop.xlane.xlu0 %1035
      %v1037 = vsel %vm691, %v550, 0.0
      %1038 = vadd.xlane.f32.xlu0 %v1037
      %v1039 = vpop.xlane.xlu0 %1038
      %v1040 = vsel %vm691, %v551, 0.0
      %1041 = vadd.xlane.f32.xlu0 %v1040
      %v1042 = vpop.xlane.xlu0 %1041
      %v1043 = vsel %vm691, %v552, 0.0
      %1044 = vadd.xlane.f32.xlu0 %v1043
      %v1045 = vpop.xlane.xlu0 %1044
      %v1046 = vsel %vm691, %v553, 0.0
      %1047 = vadd.xlane.f32.xlu0 %v1046
      %v1048 = vpop.xlane.xlu0 %1047
      %v1049 = vsel %vm691, %v554, 0.0
      %1050 = vadd.xlane.f32.xlu0 %v1049
      %v1051 = vpop.xlane.xlu0 %1050
      %v1052 = vsel %vm691, %v555, 0.0
      %1053 = vadd.xlane.f32.xlu0 %v1052
      %v1054 = vpop.xlane.xlu0 %1053
      %v1055 = vsel %vm691, %v556, 0.0
      %1056 = vadd.xlane.f32.xlu0 %v1055
      %v1057 = vpop.xlane.xlu0 %1056
      %v1058 = vsel %vm691, %v557, 0.0
      %1059 = vadd.xlane.f32.xlu0 %v1058
      %v1060 = vpop.xlane.xlu0 %1059
      %v1061 = vsel %vm691, %v558, 0.0
      %1062 = vadd.xlane.f32.xlu0 %v1061
      %v1063 = vpop.xlane.xlu0 %1062
      %v1064 = vsel %vm691, %v559, 0.0
      %1065 = vadd.xlane.f32.xlu0 %v1064
      %v1066 = vpop.xlane.xlu0 %1065
      %v1067 = vsel %vm691, %v560, 0.0
      %1068 = vadd.xlane.f32.xlu0 %v1067
      %v1069 = vpop.xlane.xlu0 %1068
      %v1070 = vsel %vm691, %v561, 0.0
      %1071 = vadd.xlane.f32.xlu0 %v1070
      %v1072 = vpop.xlane.xlu0 %1071
      %v1073 = vsel %vm691, %v562, 0.0
      %1074 = vadd.xlane.f32.xlu0 %v1073
      %v1075 = vpop.xlane.xlu0 %1074
      %v1076 = vsel %vm691, %v563, 0.0
      %1077 = vadd.xlane.f32.xlu0 %v1076
      %v1078 = vpop.xlane.xlu0 %1077
      %v1079 = vsel %vm691, %v564, 0.0
      %1080 = vadd.xlane.f32.xlu0 %v1079
      %v1081 = vpop.xlane.xlu0 %1080
      %v1082 = vsel %vm691, %v565, 0.0
      %1083 = vadd.xlane.f32.xlu0 %v1082
      %v1084 = vpop.xlane.xlu0 %1083
      %v1085 = vsel %vm691, %v566, 0.0
      %1086 = vadd.xlane.f32.xlu0 %v1085
      %v1087 = vpop.xlane.xlu0 %1086
      %v1088 = vsel %vm691, %v567, 0.0
      %1089 = vadd.xlane.f32.xlu0 %v1088
      %v1090 = vpop.xlane.xlu0 %1089
      %v1091 = vsel %vm691, %v568, 0.0
      %1092 = vadd.xlane.f32.xlu0 %v1091
      %v1093 = vpop.xlane.xlu0 %1092
      %v1094 = vsel %vm691, %v569, 0.0
      %1095 = vadd.xlane.f32.xlu0 %v1094
      %v1096 = vpop.xlane.xlu0 %1095
      %v1097 = vsel %vm691, %v570, 0.0
      %1098 = vadd.xlane.f32.xlu0 %v1097
      %v1099 = vpop.xlane.xlu0 %1098
      %v1100 = vsel %vm691, %v571, 0.0
      %1101 = vadd.xlane.f32.xlu0 %v1100
      %v1102 = vpop.xlane.xlu0 %1101
      %v1103 = vsel %vm691, %v572, 0.0
      %1104 = vadd.xlane.f32.xlu0 %v1103
      %v1105 = vpop.xlane.xlu0 %1104
      %v1106 = vsel %vm691, %v573, 0.0
      %1107 = vadd.xlane.f32.xlu0 %v1106
      %v1108 = vpop.xlane.xlu0 %1107
      %v1109 = vsel %vm691, %v574, 0.0
      %1110 = vadd.xlane.f32.xlu0 %v1109
      %v1111 = vpop.xlane.xlu0 %1110
      %v1112 = vsel %vm691, %v575, 0.0
      %1113 = vadd.xlane.f32.xlu0 %v1112
      %v1114 = vpop.xlane.xlu0 %1113
      %v1115 = vsel %vm691, %v576, 0.0
      %1116 = vadd.xlane.f32.xlu0 %v1115
      %v1117 = vpop.xlane.xlu0 %1116
      %v1118 = vsel %vm691, %v577, 0.0
      %1119 = vadd.xlane.f32.xlu0 %v1118
      %v1120 = vpop.xlane.xlu0 %1119
      %v1121 = vsel %vm691, %v578, 0.0
      %1122 = vadd.xlane.f32.xlu0 %v1121
      %v1123 = vpop.xlane.xlu0 %1122
      %v1124 = vsel %vm691, %v579, 0.0
      %1125 = vadd.xlane.f32.xlu0 %v1124
      %v1126 = vpop.xlane.xlu0 %1125
      %v1127 = vsel %vm691, %v580, 0.0
      %1128 = vadd.xlane.f32.xlu0 %v1127
      %v1129 = vpop.xlane.xlu0 %1128
      %v1130 = vsel %vm691, %v581, 0.0
      %1131 = vadd.xlane.f32.xlu0 %v1130
      %v1132 = vpop.xlane.xlu0 %1131
      %v1133 = vsel %vm691, %v582, 0.0
      %1134 = vadd.xlane.f32.xlu0 %v1133
      %v1135 = vpop.xlane.xlu0 %1134
      %v1136 = vsel %vm691, %v583, 0.0
      %1137 = vadd.xlane.f32.xlu0 %v1136
      %v1138 = vpop.xlane.xlu0 %1137
      %v1139 = vsel %vm691, %v584, 0.0
      %1140 = vadd.xlane.f32.xlu0 %v1139
      %v1141 = vpop.xlane.xlu0 %1140
      %v1142 = vsel %vm691, %v585, 0.0
      %1143 = vadd.xlane.f32.xlu0 %v1142
      %v1144 = vpop.xlane.xlu0 %1143
      %v1145 = vsel %vm691, %v586, 0.0
      %1146 = vadd.xlane.f32.xlu0 %v1145
      %v1147 = vpop.xlane.xlu0 %1146
      %v1148 = vsel %vm691, %v587, 0.0
      %1149 = vadd.xlane.f32.xlu0 %v1148
      %v1150 = vpop.xlane.xlu0 %1149
      %v1151 = vsel %vm691, %v588, 0.0
      %1152 = vadd.xlane.f32.xlu0 %v1151
      %v1153 = vpop.xlane.xlu0 %1152
      %v1154 = vsel %vm691, %v589, 0.0
      %1155 = vadd.xlane.f32.xlu0 %v1154
      %v1156 = vpop.xlane.xlu0 %1155
      %v1157 = vsel %vm691, %v590, 0.0
      %1158 = vadd.xlane.f32.xlu0 %v1157
      %v1159 = vpop.xlane.xlu0 %1158
      %v1160 = vsel %vm691, %v591, 0.0
      %1161 = vadd.xlane.f32.xlu0 %v1160
      %v1162 = vpop.xlane.xlu0 %1161
      %v1163 = vsel %vm691, %v592, 0.0
      %1164 = vadd.xlane.f32.xlu0 %v1163
      %v1165 = vpop.xlane.xlu0 %1164
      %v1166 = vsel %vm691, %v593, 0.0
      %1167 = vadd.xlane.f32.xlu0 %v1166
      %v1168 = vpop.xlane.xlu0 %1167
      %v1169 = vsel %vm691, %v594, 0.0
      %1170 = vadd.xlane.f32.xlu0 %v1169
      %v1171 = vpop.xlane.xlu0 %1170
      %v1172 = vsel %vm691, %v595, 0.0
      %1173 = vadd.xlane.f32.xlu0 %v1172
      %v1174 = vpop.xlane.xlu0 %1173
      %v1175 = vsel %vm691, %v596, 0.0
      %1176 = vadd.xlane.f32.xlu0 %v1175
      %v1177 = vpop.xlane.xlu0 %1176
      %v1178 = vsel %vm691, %v597, 0.0
      %1179 = vadd.xlane.f32.xlu0 %v1178
      %v1180 = vpop.xlane.xlu0 %1179
      %v1181 = vsel %vm691, %v598, 0.0
      %1182 = vadd.xlane.f32.xlu0 %v1181
      %v1183 = vpop.xlane.xlu0 %1182
      %v1184 = vsel %vm691, %v599, 0.0
      %1185 = vadd.xlane.f32.xlu0 %v1184
      %v1186 = vpop.xlane.xlu0 %1185
      %v1187 = vsel %vm691, %v600, 0.0
      %1188 = vadd.xlane.f32.xlu0 %v1187
      %v1189 = vpop.xlane.xlu0 %1188
      %v1190 = vsel %vm691, %v601, 0.0
      %1191 = vadd.xlane.f32.xlu0 %v1190
      %v1192 = vpop.xlane.xlu0 %1191
      %v1193 = vsel %vm691, %v602, 0.0
      %1194 = vadd.xlane.f32.xlu0 %v1193
      %v1195 = vpop.xlane.xlu0 %1194
      %v1196 = vsel %vm691, %v603, 0.0
      %1197 = vadd.xlane.f32.xlu0 %v1196
      %v1198 = vpop.xlane.xlu0 %1197
      %v1199 = vsel %vm691, %v604, 0.0
      %1200 = vadd.xlane.f32.xlu0 %v1199
      %v1201 = vpop.xlane.xlu0 %1200
      %v1202 = vsel %vm691, %v605, 0.0
      %1203 = vadd.xlane.f32.xlu0 %v1202
      %v1204 = vpop.xlane.xlu0 %1203
      %v1205 = vsel %vm691, %v606, 0.0
      %1206 = vadd.xlane.f32.xlu0 %v1205
      %v1207 = vpop.xlane.xlu0 %1206
      %v1208 = vsel %vm691, %v607, 0.0
      %1209 = vadd.xlane.f32.xlu0 %v1208
      %v1210 = vpop.xlane.xlu0 %1209
      %v1211 = vsel %vm691, %v608, 0.0
      %1212 = vadd.xlane.f32.xlu0 %v1211
      %v1213 = vpop.xlane.xlu0 %1212
      %v1214 = vsel %vm691, %v609, 0.0
      %1215 = vadd.xlane.f32.xlu0 %v1214
      %v1216 = vpop.xlane.xlu0 %1215
      %v1217 = vsel %vm691, %v610, 0.0
      %1218 = vadd.xlane.f32.xlu0 %v1217
      %v1219 = vpop.xlane.xlu0 %1218
      %v1220 = vsel %vm691, %v611, 0.0
      %1221 = vadd.xlane.f32.xlu0 %v1220
      %v1222 = vpop.xlane.xlu0 %1221
      %v1223 = vsel %vm691, %v612, 0.0
      %1224 = vadd.xlane.f32.xlu0 %v1223
      %v1225 = vpop.xlane.xlu0 %1224
      %v1226 = vsel %vm691, %v613, 0.0
      %1227 = vadd.xlane.f32.xlu0 %v1226
      %v1228 = vpop.xlane.xlu0 %1227
      %v1229 = vsel %vm691, %v614, 0.0
      %1230 = vadd.xlane.f32.xlu0 %v1229
      %v1231 = vpop.xlane.xlu0 %1230
      %v1232 = vsel %vm691, %v615, 0.0
      %1233 = vadd.xlane.f32.xlu0 %v1232
      %v1234 = vpop.xlane.xlu0 %1233
      %v1235 = vsel %vm691, %v616, 0.0
      %1236 = vadd.xlane.f32.xlu0 %v1235
      %v1237 = vpop.xlane.xlu0 %1236
      %v1238 = vsel %vm691, %v617, 0.0
      %1239 = vadd.xlane.f32.xlu0 %v1238
      %v1240 = vpop.xlane.xlu0 %1239
      %v1241 = vsel %vm691, %v618, 0.0
      %1242 = vadd.xlane.f32.xlu0 %v1241
      %v1243 = vpop.xlane.xlu0 %1242
      %v1244 = vsel %vm691, %v619, 0.0
      %1245 = vadd.xlane.f32.xlu0 %v1244
      %v1246 = vpop.xlane.xlu0 %1245
      %v1247 = vsel %vm691, %v620, 0.0
      %1248 = vadd.xlane.f32.xlu0 %v1247
      %v1249 = vpop.xlane.xlu0 %1248
      %v1250 = vsel %vm691, %v621, 0.0
      %1251 = vadd.xlane.f32.xlu0 %v1250
      %v1252 = vpop.xlane.xlu0 %1251
      %v1253 = vsel %vm691, %v622, 0.0
      %1254 = vadd.xlane.f32.xlu0 %v1253
      %v1255 = vpop.xlane.xlu0 %1254
      %v1256 = vsel %vm691, %v623, 0.0
      %1257 = vadd.xlane.f32.xlu0 %v1256
      %v1258 = vpop.xlane.xlu0 %1257
      %v1259 = vsel %vm691, %v624, 0.0
      %1260 = vadd.xlane.f32.xlu0 %v1259
      %v1261 = vpop.xlane.xlu0 %1260
      %v1262 = vsel %vm691, %v625, 0.0
      %1263 = vadd.xlane.f32.xlu0 %v1262
      %v1264 = vpop.xlane.xlu0 %1263
      %v1265 = vsel %vm691, %v626, 0.0
      %1266 = vadd.xlane.f32.xlu0 %v1265
      %v1267 = vpop.xlane.xlu0 %1266
      %v1268 = vsel %vm691, %v627, 0.0
      %1269 = vadd.xlane.f32.xlu0 %v1268
      %v1270 = vpop.xlane.xlu0 %1269
      %v1271 = vsel %vm691, %v628, 0.0
      %1272 = vadd.xlane.f32.xlu0 %v1271
      %v1273 = vpop.xlane.xlu0 %1272
      %v1274 = vsel %vm691, %v629, 0.0
      %1275 = vadd.xlane.f32.xlu0 %v1274
      %v1276 = vpop.xlane.xlu0 %1275
      %v1277 = vsel %vm691, %v630, 0.0
      %1278 = vadd.xlane.f32.xlu0 %v1277
      %v1279 = vpop.xlane.xlu0 %1278
      %v1280 = vsel %vm691, %v631, 0.0
      %1281 = vadd.xlane.f32.xlu0 %v1280
      %v1282 = vpop.xlane.xlu0 %1281
      %v1283 = vsel %vm691, %v632, 0.0
      %1284 = vadd.xlane.f32.xlu0 %v1283
      %v1285 = vpop.xlane.xlu0 %1284
      %v1286 = vsel %vm691, %v633, 0.0
      %1287 = vadd.xlane.f32.xlu0 %v1286
      %v1288 = vpop.xlane.xlu0 %1287
      %v1289 = vsel %vm691, %v634, 0.0
      %1290 = vadd.xlane.f32.xlu0 %v1289
      %v1291 = vpop.xlane.xlu0 %1290
      %v1292 = vsel %vm691, %v635, 0.0
      %1293 = vadd.xlane.f32.xlu0 %v1292
      %v1294 = vpop.xlane.xlu0 %1293
      %v1295 = vsel %vm691, %v636, 0.0
      %1296 = vadd.xlane.f32.xlu0 %v1295
      %v1297 = vpop.xlane.xlu0 %1296
      %v1298 = vsel %vm691, %v637, 0.0
      %1299 = vadd.xlane.f32.xlu0 %v1298
      %v1300 = vpop.xlane.xlu0 %1299
      %v1301 = vsel %vm691, %v638, 0.0
      %1302 = vadd.xlane.f32.xlu0 %v1301
      %v1303 = vpop.xlane.xlu0 %1302
      %v1304 = vsel %vm691, %v639, 0.0
      %1305 = vadd.xlane.f32.xlu0 %v1304
      %v1306 = vpop.xlane.xlu0 %1305
      %v1307 = vsel %vm691, %v640, 0.0
      %1308 = vadd.xlane.f32.xlu0 %v1307
      %v1309 = vpop.xlane.xlu0 %1308
      %v1310 = vsel %vm691, %v641, 0.0
      %1311 = vadd.xlane.f32.xlu0 %v1310
      %v1312 = vpop.xlane.xlu0 %1311
      %v1313 = vsel %vm691, %v642, 0.0
      %1314 = vadd.xlane.f32.xlu0 %v1313
      %v1315 = vpop.xlane.xlu0 %1314
      %v1316 = vsel %vm691, %v643, 0.0
      %1317 = vadd.xlane.f32.xlu0 %v1316
      %v1318 = vpop.xlane.xlu0 %1317
      %v1319 = vsel %vm691, %v644, 0.0
      %1320 = vadd.xlane.f32.xlu0 %v1319
      %v1321 = vpop.xlane.xlu0 %1320
      %v1322 = vsel %vm691, %v645, 0.0
      %1323 = vadd.xlane.f32.xlu0 %v1322
      %v1324 = vpop.xlane.xlu0 %1323
      %v1325 = vsel %vm691, %v646, 0.0
      %1326 = vadd.xlane.f32.xlu0 %v1325
      %v1327 = vpop.xlane.xlu0 %1326
      %v1328 = vsel %vm691, %v647, 0.0
      %1329 = vadd.xlane.f32.xlu0 %v1328
      %v1330 = vpop.xlane.xlu0 %1329
      %v1331 = vsel %vm691, %v648, 0.0
      %1332 = vadd.xlane.f32.xlu0 %v1331
      %v1333 = vpop.xlane.xlu0 %1332
      %v1334 = vsel %vm691, %v649, 0.0
      %1335 = vadd.xlane.f32.xlu0 %v1334
      %v1336 = vpop.xlane.xlu0 %1335
      %v1337 = vsel %vm691, %v650, 0.0
      %1338 = vadd.xlane.f32.xlu0 %v1337
      %v1339 = vpop.xlane.xlu0 %1338
      %v1340 = vsel %vm691, %v651, 0.0
      %1341 = vadd.xlane.f32.xlu0 %v1340
      %v1342 = vpop.xlane.xlu0 %1341
      %v1343 = vsel %vm691, %v652, 0.0
      %1344 = vadd.xlane.f32.xlu0 %v1343
      %v1345 = vpop.xlane.xlu0 %1344
      %v1346 = vsel %vm691, %v653, 0.0
      %1347 = vadd.xlane.f32.xlu0 %v1346
      %v1348 = vpop.xlane.xlu0 %1347
      %v1349 = vsel %vm691, %v654, 0.0
      %1350 = vadd.xlane.f32.xlu0 %v1349
      %v1351 = vpop.xlane.xlu0 %1350
      %v1352 = vsel %vm691, %v655, 0.0
      %1353 = vadd.xlane.f32.xlu0 %v1352
      %v1354 = vpop.xlane.xlu0 %1353
      %v1355 = vsel %vm691, %v656, 0.0
      %1356 = vadd.xlane.f32.xlu0 %v1355
      %v1357 = vpop.xlane.xlu0 %1356
      %v1358 = vsel %vm691, %v657, 0.0
      %1359 = vadd.xlane.f32.xlu0 %v1358
      %v1360 = vpop.xlane.xlu0 %1359
      %v1361 = vsel %vm691, %v658, 0.0
      %1362 = vadd.xlane.f32.xlu0 %v1361
      %v1363 = vpop.xlane.xlu0 %1362
      %v1364 = vsel %vm691, %v659, 0.0
      %1365 = vadd.xlane.f32.xlu0 %v1364
      %v1366 = vpop.xlane.xlu0 %1365
      %v1367 = vsel %vm691, %v660, 0.0
      %1368 = vadd.xlane.f32.xlu0 %v1367
      %v1369 = vpop.xlane.xlu0 %1368
      %v1370 = vsel %vm691, %v661, 0.0
      %1371 = vadd.xlane.f32.xlu0 %v1370
      %v1372 = vpop.xlane.xlu0 %1371
      %v1373 = vsel %vm691, %v662, 0.0
      %1374 = vadd.xlane.f32.xlu0 %v1373
      %v1375 = vpop.xlane.xlu0 %1374
      %v1376 = vsel %vm691, %v663, 0.0
      %1377 = vadd.xlane.f32.xlu0 %v1376
      %v1378 = vpop.xlane.xlu0 %1377
      %v1379 = vsel %vm691, %v664, 0.0
      %1380 = vadd.xlane.f32.xlu0 %v1379
      %v1381 = vpop.xlane.xlu0 %1380
      %v1382 = vsel %vm691, %v665, 0.0
      %1383 = vadd.xlane.f32.xlu0 %v1382
      %v1384 = vpop.xlane.xlu0 %1383
      %v1385 = vsel %vm691, %v666, 0.0
      %1386 = vadd.xlane.f32.xlu0 %v1385
      %v1387 = vpop.xlane.xlu0 %1386
      %v1388 = vsel %vm691, %v667, 0.0
      %1389 = vadd.xlane.f32.xlu0 %v1388
      %v1390 = vpop.xlane.xlu0 %1389
      %v1391 = vsel %vm691, %v668, 0.0
      %1392 = vadd.xlane.f32.xlu0 %v1391
      %v1393 = vpop.xlane.xlu0 %1392
      %v1394 = vsel %vm691, %v669, 0.0
      %1395 = vadd.xlane.f32.xlu0 %v1394
      %v1396 = vpop.xlane.xlu0 %1395
      %v1397 = vsel %vm691, %v670, 0.0
      %1398 = vadd.xlane.f32.xlu0 %v1397
      %v1399 = vpop.xlane.xlu0 %1398
      %v1400 = vsel %vm691, %v671, 0.0
      %1401 = vadd.xlane.f32.xlu0 %v1400
      %v1402 = vpop.xlane.xlu0 %1401
      %v1403 = vsel %vm691, %v672, 0.0
      %1404 = vadd.xlane.f32.xlu0 %v1403
      %v1405 = vpop.xlane.xlu0 %1404
      %v1406 = vsel %vm691, %v673, 0.0
      %1407 = vadd.xlane.f32.xlu0 %v1406
      %v1408 = vpop.xlane.xlu0 %1407
      %v1409 = vsel %vm691, %v674, 0.0
      %1410 = vadd.xlane.f32.xlu0 %v1409
      %v1411 = vpop.xlane.xlu0 %1410
      %v1412 = vsel %vm691, %v675, 0.0
      %1413 = vadd.xlane.f32.xlu0 %v1412
      %v1414 = vpop.xlane.xlu0 %1413
      %v1415 = vsel %vm691, %v676, 0.0
      %1416 = vadd.xlane.f32.xlu0 %v1415
      %v1417 = vpop.xlane.xlu0 %1416
      %v1418 = vsel %vm691, %v677, 0.0
      %1419 = vadd.xlane.f32.xlu0 %v1418
      %v1420 = vpop.xlane.xlu0 %1419
      %v1421 = vsel %vm691, %v678, 0.0
      %1422 = vadd.xlane.f32.xlu0 %v1421
      %v1423 = vpop.xlane.xlu0 %1422
      %v1424 = vsel %vm691, %v679, 0.0
      %1425 = vadd.xlane.f32.xlu0 %v1424
      %v1426 = vpop.xlane.xlu0 %1425
      %v1427 = vsel %vm691, %v680, 0.0
      %1428 = vadd.xlane.f32.xlu0 %v1427
      %v1429 = vpop.xlane.xlu0 %1428
      %v1430 = vsel %vm691, %v681, 0.0
      %1431 = vadd.xlane.f32.xlu0 %v1430
      %v1432 = vpop.xlane.xlu0 %1431
      %v1433 = vsel %vm691, %v682, 0.0
      %1434 = vadd.xlane.f32.xlu0 %v1433
      %v1435 = vpop.xlane.xlu0 %1434
      %v1436 = vsel %vm691, %v683, 0.0
      %1437 = vadd.xlane.f32.xlu0 %v1436
      %v1438 = vpop.xlane.xlu0 %1437
      %v1439 = vsel %vm691, %v684, 0.0
      %1440 = vadd.xlane.f32.xlu0 %v1439
      %v1441 = vpop.xlane.xlu0 %1440
      %v1442 = vsel %vm691, %v685, 0.0
      %1443 = vadd.xlane.f32.xlu0 %v1442
      %v1444 = vpop.xlane.xlu0 %1443
      %v1445 = vsel %vm691, %v686, 0.0
      %1446 = vadd.xlane.f32.xlu0 %v1445
      %v1447 = vpop.xlane.xlu0 %1446
      %v1448 = vsel %vm691, %v687, 0.0
      %1449 = vadd.xlane.f32.xlu0 %v1448
      %v1450 = vpop.xlane.xlu0 %1449
      %v1451 = vsel %vm691, %v688, 0.0
      %1452 = vadd.xlane.f32.xlu0 %v1451
      %v1453 = vpop.xlane.xlu0 %1452
      %v1454 = vsel %vm691, %v689, 0.0
      %1455 = vadd.xlane.f32.xlu0 %v1454
      %v1456 = vpop.xlane.xlu0 %1455
      %v1457 = vsel %vm691, %v690, 0.0
      %1458 = vadd.xlane.f32.xlu0 %v1457
      %v1459 = vpop.xlane.xlu0 %1458
      %s1460 = sld [smem:[#allocation2]]
      %v1461 = vstv %s1460
      %v1462 = vadd.f32 %v694, %v1461
      %v1463 = vadd.f32 %v697, %v1461
      %v1464 = vadd.f32 %v700, %v1461
      %v1465 = vadd.f32 %v703, %v1461
      %v1466 = vadd.f32 %v706, %v1461
      %v1467 = vadd.f32 %v709, %v1461
      %v1468 = vadd.f32 %v712, %v1461
      %v1469 = vadd.f32 %v715, %v1461
      %v1470 = vadd.f32 %v718, %v1461
      %v1471 = vadd.f32 %v721, %v1461
      %v1472 = vadd.f32 %v724, %v1461
      %v1473 = vadd.f32 %v727, %v1461
      %v1474 = vadd.f32 %v730, %v1461
      %v1475 = vadd.f32 %v733, %v1461
      %v1476 = vadd.f32 %v736, %v1461
      %v1477 = vadd.f32 %v739, %v1461
      %v1478 = vadd.f32 %v742, %v1461
      %v1479 = vadd.f32 %v745, %v1461
      %v1480 = vadd.f32 %v748, %v1461
      %v1481 = vadd.f32 %v751, %v1461
      %v1482 = vadd.f32 %v754, %v1461
      %v1483 = vadd.f32 %v757, %v1461
      %v1484 = vadd.f32 %v760, %v1461
      %v1485 = vadd.f32 %v763, %v1461
      %v1486 = vadd.f32 %v766, %v1461
      %v1487 = vadd.f32 %v769, %v1461
      %v1488 = vadd.f32 %v772, %v1461
      %v1489 = vadd.f32 %v775, %v1461
      %v1490 = vadd.f32 %v778, %v1461
      %v1491 = vadd.f32 %v781, %v1461
      %v1492 = vadd.f32 %v784, %v1461
      %v1493 = vadd.f32 %v787, %v1461
      %v1494 = vadd.f32 %v790, %v1461
      %v1495 = vadd.f32 %v793, %v1461
      %v1496 = vadd.f32 %v796, %v1461
      %v1497 = vadd.f32 %v799, %v1461
      %v1498 = vadd.f32 %v802, %v1461
      %v1499 = vadd.f32 %v805, %v1461
      %v1500 = vadd.f32 %v808, %v1461
      %v1501 = vadd.f32 %v811, %v1461
      %v1502 = vadd.f32 %v814, %v1461
      %v1503 = vadd.f32 %v817, %v1461
      %v1504 = vadd.f32 %v820, %v1461
      %v1505 = vadd.f32 %v823, %v1461
      %v1506 = vadd.f32 %v826, %v1461
      %v1507 = vadd.f32 %v829, %v1461
      %v1508 = vadd.f32 %v832, %v1461
      %v1509 = vadd.f32 %v835, %v1461
      %v1510 = vadd.f32 %v838, %v1461
      %v1511 = vadd.f32 %v841, %v1461
      %v1512 = vadd.f32 %v844, %v1461
      %v1513 = vadd.f32 %v847, %v1461
      %v1514 = vadd.f32 %v850, %v1461
      %v1515 = vadd.f32 %v853, %v1461
      %v1516 = vadd.f32 %v856, %v1461
      %v1517 = vadd.f32 %v859, %v1461
      %v1518 = vadd.f32 %v862, %v1461
      %v1519 = vadd.f32 %v865, %v1461
      %v1520 = vadd.f32 %v868, %v1461
      %v1521 = vadd.f32 %v871, %v1461
      %v1522 = vadd.f32 %v874, %v1461
      %v1523 = vadd.f32 %v877, %v1461
      %v1524 = vadd.f32 %v880, %v1461
      %v1525 = vadd.f32 %v883, %v1461
      %v1526 = vadd.f32 %v886, %v1461
      %v1527 = vadd.f32 %v889, %v1461
      %v1528 = vadd.f32 %v892, %v1461
      %v1529 = vadd.f32 %v895, %v1461
      %v1530 = vadd.f32 %v898, %v1461
      %v1531 = vadd.f32 %v901, %v1461
      %v1532 = vadd.f32 %v904, %v1461
      %v1533 = vadd.f32 %v907, %v1461
      %v1534 = vadd.f32 %v910, %v1461
      %v1535 = vadd.f32 %v913, %v1461
      %v1536 = vadd.f32 %v916, %v1461
      %v1537 = vadd.f32 %v919, %v1461
      %v1538 = vadd.f32 %v922, %v1461
      %v1539 = vadd.f32 %v925, %v1461
      %v1540 = vadd.f32 %v928, %v1461
      %v1541 = vadd.f32 %v931, %v1461
      %v1542 = vadd.f32 %v934, %v1461
      %v1543 = vadd.f32 %v937, %v1461
      %v1544 = vadd.f32 %v940, %v1461
      %v1545 = vadd.f32 %v943, %v1461
      %v1546 = vadd.f32 %v946, %v1461
      %v1547 = vadd.f32 %v949, %v1461
      %v1548 = vadd.f32 %v952, %v1461
      %v1549 = vadd.f32 %v955, %v1461
      %v1550 = vadd.f32 %v958, %v1461
      %v1551 = vadd.f32 %v961, %v1461
      %v1552 = vadd.f32 %v964, %v1461
      %v1553 = vadd.f32 %v967, %v1461
      %v1554 = vadd.f32 %v970, %v1461
      %v1555 = vadd.f32 %v973, %v1461
      %v1556 = vadd.f32 %v976, %v1461
      %v1557 = vadd.f32 %v979, %v1461
      %v1558 = vadd.f32 %v982, %v1461
      %v1559 = vadd.f32 %v985, %v1461
      %v1560 = vadd.f32 %v988, %v1461
      %v1561 = vadd.f32 %v991, %v1461
      %v1562 = vadd.f32 %v994, %v1461
      %v1563 = vadd.f32 %v997, %v1461
      %v1564 = vadd.f32 %v1000, %v1461
      %v1565 = vadd.f32 %v1003, %v1461
      %v1566 = vadd.f32 %v1006, %v1461
      %v1567 = vadd.f32 %v1009, %v1461
      %v1568 = vadd.f32 %v1012, %v1461
      %v1569 = vadd.f32 %v1015, %v1461
      %v1570 = vadd.f32 %v1018, %v1461
      %v1571 = vadd.f32 %v1021, %v1461
      %v1572 = vadd.f32 %v1024, %v1461
      %v1573 = vadd.f32 %v1027, %v1461
      %v1574 = vadd.f32 %v1030, %v1461
      %v1575 = vadd.f32 %v1033, %v1461
      %v1576 = vadd.f32 %v1036, %v1461
      %v1577 = vadd.f32 %v1039, %v1461
      %v1578 = vadd.f32 %v1042, %v1461
      %v1579 = vadd.f32 %v1045, %v1461
      %v1580 = vadd.f32 %v1048, %v1461
      %v1581 = vadd.f32 %v1051, %v1461
      %v1582 = vadd.f32 %v1054, %v1461
      %v1583 = vadd.f32 %v1057, %v1461
      %v1584 = vadd.f32 %v1060, %v1461
      %v1585 = vadd.f32 %v1063, %v1461
      %v1586 = vadd.f32 %v1066, %v1461
      %v1587 = vadd.f32 %v1069, %v1461
      %v1588 = vadd.f32 %v1072, %v1461
      %v1589 = vadd.f32 %v1075, %v1461
      %v1590 = vadd.f32 %v1078, %v1461
      %v1591 = vadd.f32 %v1081, %v1461
      %v1592 = vadd.f32 %v1084, %v1461
      %v1593 = vadd.f32 %v1087, %v1461
      %v1594 = vadd.f32 %v1090, %v1461
      %v1595 = vadd.f32 %v1093, %v1461
      %v1596 = vadd.f32 %v1096, %v1461
      %v1597 = vadd.f32 %v1099, %v1461
      %v1598 = vadd.f32 %v1102, %v1461
      %v1599 = vadd.f32 %v1105, %v1461
      %v1600 = vadd.f32 %v1108, %v1461
      %v1601 = vadd.f32 %v1111, %v1461
      %v1602 = vadd.f32 %v1114, %v1461
      %v1603 = vadd.f32 %v1117, %v1461
      %v1604 = vadd.f32 %v1120, %v1461
      %v1605 = vadd.f32 %v1123, %v1461
      %v1606 = vadd.f32 %v1126, %v1461
      %v1607 = vadd.f32 %v1129, %v1461
      %v1608 = vadd.f32 %v1132, %v1461
      %v1609 = vadd.f32 %v1135, %v1461
      %v1610 = vadd.f32 %v1138, %v1461
      %v1611 = vadd.f32 %v1141, %v1461
      %v1612 = vadd.f32 %v1144, %v1461
      %v1613 = vadd.f32 %v1147, %v1461
      %v1614 = vadd.f32 %v1150, %v1461
      %v1615 = vadd.f32 %v1153, %v1461
      %v1616 = vadd.f32 %v1156, %v1461
      %v1617 = vadd.f32 %v1159, %v1461
      %v1618 = vadd.f32 %v1162, %v1461
      %v1619 = vadd.f32 %v1165, %v1461
      %v1620 = vadd.f32 %v1168, %v1461
      %v1621 = vadd.f32 %v1171, %v1461
      %v1622 = vadd.f32 %v1174, %v1461
      %v1623 = vadd.f32 %v1177, %v1461
      %v1624 = vadd.f32 %v1180, %v1461
      %v1625 = vadd.f32 %v1183, %v1461
      %v1626 = vadd.f32 %v1186, %v1461
      %v1627 = vadd.f32 %v1189, %v1461
      %v1628 = vadd.f32 %v1192, %v1461
      %v1629 = vadd.f32 %v1195, %v1461
      %v1630 = vadd.f32 %v1198, %v1461
      %v1631 = vadd.f32 %v1201, %v1461
      %v1632 = vadd.f32 %v1204, %v1461
      %v1633 = vadd.f32 %v1207, %v1461
      %v1634 = vadd.f32 %v1210, %v1461
      %v1635 = vadd.f32 %v1213, %v1461
      %v1636 = vadd.f32 %v1216, %v1461
      %v1637 = vadd.f32 %v1219, %v1461
      %v1638 = vadd.f32 %v1222, %v1461
      %v1639 = vadd.f32 %v1225, %v1461
      %v1640 = vadd.f32 %v1228, %v1461
      %v1641 = vadd.f32 %v1231, %v1461
      %v1642 = vadd.f32 %v1234, %v1461
      %v1643 = vadd.f32 %v1237, %v1461
      %v1644 = vadd.f32 %v1240, %v1461
      %v1645 = vadd.f32 %v1243, %v1461
      %v1646 = vadd.f32 %v1246, %v1461
      %v1647 = vadd.f32 %v1249, %v1461
      %v1648 = vadd.f32 %v1252, %v1461
      %v1649 = vadd.f32 %v1255, %v1461
      %v1650 = vadd.f32 %v1258, %v1461
      %v1651 = vadd.f32 %v1261, %v1461
      %v1652 = vadd.f32 %v1264, %v1461
      %v1653 = vadd.f32 %v1267, %v1461
      %v1654 = vadd.f32 %v1270, %v1461
      %v1655 = vadd.f32 %v1273, %v1461
      %v1656 = vadd.f32 %v1276, %v1461
      %v1657 = vadd.f32 %v1279, %v1461
      %v1658 = vadd.f32 %v1282, %v1461
      %v1659 = vadd.f32 %v1285, %v1461
      %v1660 = vadd.f32 %v1288, %v1461
      %v1661 = vadd.f32 %v1291, %v1461
      %v1662 = vadd.f32 %v1294, %v1461
      %v1663 = vadd.f32 %v1297, %v1461
      %v1664 = vadd.f32 %v1300, %v1461
      %v1665 = vadd.f32 %v1303, %v1461
      %v1666 = vadd.f32 %v1306, %v1461
      %v1667 = vadd.f32 %v1309, %v1461
      %v1668 = vadd.f32 %v1312, %v1461
      %v1669 = vadd.f32 %v1315, %v1461
      %v1670 = vadd.f32 %v1318, %v1461
      %v1671 = vadd.f32 %v1321, %v1461
      %v1672 = vadd.f32 %v1324, %v1461
      %v1673 = vadd.f32 %v1327, %v1461
      %v1674 = vadd.f32 %v1330, %v1461
      %v1675 = vadd.f32 %v1333, %v1461
      %v1676 = vadd.f32 %v1336, %v1461
      %v1677 = vadd.f32 %v1339, %v1461
      %v1678 = vadd.f32 %v1342, %v1461
      %v1679 = vadd.f32 %v1345, %v1461
      %v1680 = vadd.f32 %v1348, %v1461
      %v1681 = vadd.f32 %v1351, %v1461
      %v1682 = vadd.f32 %v1354, %v1461
      %v1683 = vadd.f32 %v1357, %v1461
      %v1684 = vadd.f32 %v1360, %v1461
      %v1685 = vadd.f32 %v1363, %v1461
      %v1686 = vadd.f32 %v1366, %v1461
      %v1687 = vadd.f32 %v1369, %v1461
      %v1688 = vadd.f32 %v1372, %v1461
      %v1689 = vadd.f32 %v1375, %v1461
      %v1690 = vadd.f32 %v1378, %v1461
      %v1691 = vadd.f32 %v1381, %v1461
      %v1692 = vadd.f32 %v1384, %v1461
      %v1693 = vadd.f32 %v1387, %v1461
      %v1694 = vadd.f32 %v1390, %v1461
      %v1695 = vadd.f32 %v1393, %v1461
      %v1696 = vadd.f32 %v1396, %v1461
      %v1697 = vadd.f32 %v1399, %v1461
      %v1698 = vadd.f32 %v1402, %v1461
      %v1699 = vadd.f32 %v1405, %v1461
      %v1700 = vadd.f32 %v1408, %v1461
      %v1701 = vadd.f32 %v1411, %v1461
      %v1702 = vadd.f32 %v1414, %v1461
      %v1703 = vadd.f32 %v1417, %v1461
      %v1704 = vadd.f32 %v1420, %v1461
      %v1705 = vadd.f32 %v1423, %v1461
      %v1706 = vadd.f32 %v1426, %v1461
      %v1707 = vadd.f32 %v1429, %v1461
      %v1708 = vadd.f32 %v1432, %v1461
      %v1709 = vadd.f32 %v1435, %v1461
      %v1710 = vadd.f32 %v1438, %v1461
      %v1711 = vadd.f32 %v1441, %v1461
      %v1712 = vadd.f32 %v1444, %v1461
      %v1713 = vadd.f32 %v1447, %v1461
      %v1714 = vadd.f32 %v1450, %v1461
      %v1715 = vadd.f32 %v1453, %v1461
      %v1716 = vadd.f32 %v1456, %v1461
      %v1717 = vadd.f32 %v1459, %v1461
      %vm1718 = vcmask 7168
      %1719 = vst.msk [vmem:[%s173] sm:$0xff] %vm1718, %v1462
      %1720 = vst.msk [vmem:[%s173 + $0x8] sm:$0xff] %vm1718, %v1463
      %1721 = vst.msk [vmem:[%s173 + $0x10] sm:$0xff] %vm1718, %v1464
      %1722 = vst.msk [vmem:[%s173 + $0x18] sm:$0xff] %vm1718, %v1465
      %1723 = vst.msk [vmem:[%s173 + $0x20] sm:$0xff] %vm1718, %v1466
      %1724 = vst.msk [vmem:[%s173 + $0x28] sm:$0xff] %vm1718, %v1467
      %1725 = vst.msk [vmem:[%s173 + $0x30] sm:$0xff] %vm1718, %v1468
      %1726 = vst.msk [vmem:[%s173 + $0x38] sm:$0xff] %vm1718, %v1469
      %1727 = vst.msk [vmem:[%s173 + $0x40] sm:$0xff] %vm1718, %v1470
      %1728 = vst.msk [vmem:[%s173 + $0x48] sm:$0xff] %vm1718, %v1471
      %1729 = vst.msk [vmem:[%s173 + $0x50] sm:$0xff] %vm1718, %v1472
      %1730 = vst.msk [vmem:[%s173 + $0x58] sm:$0xff] %vm1718, %v1473
      %1731 = vst.msk [vmem:[%s173 + $0x60] sm:$0xff] %vm1718, %v1474
      %1732 = vst.msk [vmem:[%s173 + $0x68] sm:$0xff] %vm1718, %v1475
      %1733 = vst.msk [vmem:[%s173 + $0x70] sm:$0xff] %vm1718, %v1476
      %1734 = vst.msk [vmem:[%s173 + $0x78] sm:$0xff] %vm1718, %v1477
      %1735 = vst.msk [vmem:[%s173 + $0x80] sm:$0xff] %vm1718, %v1478
      %1736 = vst.msk [vmem:[%s173 + $0x88] sm:$0xff] %vm1718, %v1479
      %1737 = vst.msk [vmem:[%s173 + $0x90] sm:$0xff] %vm1718, %v1480
      %1738 = vst.msk [vmem:[%s173 + $0x98] sm:$0xff] %vm1718, %v1481
      %1739 = vst.msk [vmem:[%s173 + $0xa0] sm:$0xff] %vm1718, %v1482
      %1740 = vst.msk [vmem:[%s173 + $0xa8] sm:$0xff] %vm1718, %v1483
      %1741 = vst.msk [vmem:[%s173 + $0xb0] sm:$0xff] %vm1718, %v1484
      %1742 = vst.msk [vmem:[%s173 + $0xb8] sm:$0xff] %vm1718, %v1485
      %1743 = vst.msk [vmem:[%s173 + $0xc0] sm:$0xff] %vm1718, %v1486
      %1744 = vst.msk [vmem:[%s173 + $0xc8] sm:$0xff] %vm1718, %v1487
      %1745 = vst.msk [vmem:[%s173 + $0xd0] sm:$0xff] %vm1718, %v1488
      %1746 = vst.msk [vmem:[%s173 + $0xd8] sm:$0xff] %vm1718, %v1489
      %1747 = vst.msk [vmem:[%s173 + $0xe0] sm:$0xff] %vm1718, %v1490
      %1748 = vst.msk [vmem:[%s173 + $0xe8] sm:$0xff] %vm1718, %v1491
      %1749 = vst.msk [vmem:[%s173 + $0xf0] sm:$0xff] %vm1718, %v1492
      %1750 = vst.msk [vmem:[%s173 + $0xf8] sm:$0xff] %vm1718, %v1493
      %1751 = vst.msk [vmem:[%s173 + $0x100] sm:$0xff] %vm1718, %v1494
      %1752 = vst.msk [vmem:[%s173 + $0x108] sm:$0xff] %vm1718, %v1495
      %1753 = vst.msk [vmem:[%s173 + $0x110] sm:$0xff] %vm1718, %v1496
      %1754 = vst.msk [vmem:[%s173 + $0x118] sm:$0xff] %vm1718, %v1497
      %1755 = vst.msk [vmem:[%s173 + $0x120] sm:$0xff] %vm1718, %v1498
      %1756 = vst.msk [vmem:[%s173 + $0x128] sm:$0xff] %vm1718, %v1499
      %1757 = vst.msk [vmem:[%s173 + $0x130] sm:$0xff] %vm1718, %v1500
      %1758 = vst.msk [vmem:[%s173 + $0x138] sm:$0xff] %vm1718, %v1501
      %1759 = vst.msk [vmem:[%s173 + $0x140] sm:$0xff] %vm1718, %v1502
      %1760 = vst.msk [vmem:[%s173 + $0x148] sm:$0xff] %vm1718, %v1503
      %1761 = vst.msk [vmem:[%s173 + $0x150] sm:$0xff] %vm1718, %v1504
      %1762 = vst.msk [vmem:[%s173 + $0x158] sm:$0xff] %vm1718, %v1505
      %1763 = vst.msk [vmem:[%s173 + $0x160] sm:$0xff] %vm1718, %v1506
      %1764 = vst.msk [vmem:[%s173 + $0x168] sm:$0xff] %vm1718, %v1507
      %1765 = vst.msk [vmem:[%s173 + $0x170] sm:$0xff] %vm1718, %v1508
      %1766 = vst.msk [vmem:[%s173 + $0x178] sm:$0xff] %vm1718, %v1509
      %1767 = vst.msk [vmem:[%s173 + $0x180] sm:$0xff] %vm1718, %v1510
      %1768 = vst.msk [vmem:[%s173 + $0x188] sm:$0xff] %vm1718, %v1511
      %1769 = vst.msk [vmem:[%s173 + $0x190] sm:$0xff] %vm1718, %v1512
      %1770 = vst.msk [vmem:[%s173 + $0x198] sm:$0xff] %vm1718, %v1513
      %1771 = vst.msk [vmem:[%s173 + $0x1a0] sm:$0xff] %vm1718, %v1514
      %1772 = vst.msk [vmem:[%s173 + $0x1a8] sm:$0xff] %vm1718, %v1515
      %1773 = vst.msk [vmem:[%s173 + $0x1b0] sm:$0xff] %vm1718, %v1516
      %1774 = vst.msk [vmem:[%s173 + $0x1b8] sm:$0xff] %vm1718, %v1517
      %1775 = vst.msk [vmem:[%s173 + $0x1c0] sm:$0xff] %vm1718, %v1518
      %1776 = vst.msk [vmem:[%s173 + $0x1c8] sm:$0xff] %vm1718, %v1519
      %1777 = vst.msk [vmem:[%s173 + $0x1d0] sm:$0xff] %vm1718, %v1520
      %1778 = vst.msk [vmem:[%s173 + $0x1d8] sm:$0xff] %vm1718, %v1521
      %1779 = vst.msk [vmem:[%s173 + $0x1e0] sm:$0xff] %vm1718, %v1522
      %1780 = vst.msk [vmem:[%s173 + $0x1e8] sm:$0xff] %vm1718, %v1523
      %1781 = vst.msk [vmem:[%s173 + $0x1f0] sm:$0xff] %vm1718, %v1524
      %1782 = vst.msk [vmem:[%s173 + $0x1f8] sm:$0xff] %vm1718, %v1525
      %1783 = vst.msk [vmem:[%s173 + $0x200] sm:$0xff] %vm1718, %v1526
      %1784 = vst.msk [vmem:[%s173 + $0x208] sm:$0xff] %vm1718, %v1527
      %1785 = vst.msk [vmem:[%s173 + $0x210] sm:$0xff] %vm1718, %v1528
      %1786 = vst.msk [vmem:[%s173 + $0x218] sm:$0xff] %vm1718, %v1529
      %1787 = vst.msk [vmem:[%s173 + $0x220] sm:$0xff] %vm1718, %v1530
      %1788 = vst.msk [vmem:[%s173 + $0x228] sm:$0xff] %vm1718, %v1531
      %1789 = vst.msk [vmem:[%s173 + $0x230] sm:$0xff] %vm1718, %v1532
      %1790 = vst.msk [vmem:[%s173 + $0x238] sm:$0xff] %vm1718, %v1533
      %1791 = vst.msk [vmem:[%s173 + $0x240] sm:$0xff] %vm1718, %v1534
      %1792 = vst.msk [vmem:[%s173 + $0x248] sm:$0xff] %vm1718, %v1535
      %1793 = vst.msk [vmem:[%s173 + $0x250] sm:$0xff] %vm1718, %v1536
      %1794 = vst.msk [vmem:[%s173 + $0x258] sm:$0xff] %vm1718, %v1537
      %1795 = vst.msk [vmem:[%s173 + $0x260] sm:$0xff] %vm1718, %v1538
      %1796 = vst.msk [vmem:[%s173 + $0x268] sm:$0xff] %vm1718, %v1539
      %1797 = vst.msk [vmem:[%s173 + $0x270] sm:$0xff] %vm1718, %v1540
      %1798 = vst.msk [vmem:[%s173 + $0x278] sm:$0xff] %vm1718, %v1541
      %1799 = vst.msk [vmem:[%s173 + $0x280] sm:$0xff] %vm1718, %v1542
      %1800 = vst.msk [vmem:[%s173 + $0x288] sm:$0xff] %vm1718, %v1543
      %1801 = vst.msk [vmem:[%s173 + $0x290] sm:$0xff] %vm1718, %v1544
      %1802 = vst.msk [vmem:[%s173 + $0x298] sm:$0xff] %vm1718, %v1545
      %1803 = vst.msk [vmem:[%s173 + $0x2a0] sm:$0xff] %vm1718, %v1546
      %1804 = vst.msk [vmem:[%s173 + $0x2a8] sm:$0xff] %vm1718, %v1547
      %1805 = vst.msk [vmem:[%s173 + $0x2b0] sm:$0xff] %vm1718, %v1548
      %1806 = vst.msk [vmem:[%s173 + $0x2b8] sm:$0xff] %vm1718, %v1549
      %1807 = vst.msk [vmem:[%s173 + $0x2c0] sm:$0xff] %vm1718, %v1550
      %1808 = vst.msk [vmem:[%s173 + $0x2c8] sm:$0xff] %vm1718, %v1551
      %1809 = vst.msk [vmem:[%s173 + $0x2d0] sm:$0xff] %vm1718, %v1552
      %1810 = vst.msk [vmem:[%s173 + $0x2d8] sm:$0xff] %vm1718, %v1553
      %1811 = vst.msk [vmem:[%s173 + $0x2e0] sm:$0xff] %vm1718, %v1554
      %1812 = vst.msk [vmem:[%s173 + $0x2e8] sm:$0xff] %vm1718, %v1555
      %1813 = vst.msk [vmem:[%s173 + $0x2f0] sm:$0xff] %vm1718, %v1556
      %1814 = vst.msk [vmem:[%s173 + $0x2f8] sm:$0xff] %vm1718, %v1557
      %1815 = vst.msk [vmem:[%s173 + $0x300] sm:$0xff] %vm1718, %v1558
      %1816 = vst.msk [vmem:[%s173 + $0x308] sm:$0xff] %vm1718, %v1559
      %1817 = vst.msk [vmem:[%s173 + $0x310] sm:$0xff] %vm1718, %v1560
      %1818 = vst.msk [vmem:[%s173 + $0x318] sm:$0xff] %vm1718, %v1561
      %1819 = vst.msk [vmem:[%s173 + $0x320] sm:$0xff] %vm1718, %v1562
      %1820 = vst.msk [vmem:[%s173 + $0x328] sm:$0xff] %vm1718, %v1563
      %1821 = vst.msk [vmem:[%s173 + $0x330] sm:$0xff] %vm1718, %v1564
      %1822 = vst.msk [vmem:[%s173 + $0x338] sm:$0xff] %vm1718, %v1565
      %1823 = vst.msk [vmem:[%s173 + $0x340] sm:$0xff] %vm1718, %v1566
      %1824 = vst.msk [vmem:[%s173 + $0x348] sm:$0xff] %vm1718, %v1567
      %1825 = vst.msk [vmem:[%s173 + $0x350] sm:$0xff] %vm1718, %v1568
      %1826 = vst.msk [vmem:[%s173 + $0x358] sm:$0xff] %vm1718, %v1569
      %1827 = vst.msk [vmem:[%s173 + $0x360] sm:$0xff] %vm1718, %v1570
      %1828 = vst.msk [vmem:[%s173 + $0x368] sm:$0xff] %vm1718, %v1571
      %1829 = vst.msk [vmem:[%s173 + $0x370] sm:$0xff] %vm1718, %v1572
      %1830 = vst.msk [vmem:[%s173 + $0x378] sm:$0xff] %vm1718, %v1573
      %1831 = vst.msk [vmem:[%s173 + $0x380] sm:$0xff] %vm1718, %v1574
      %1832 = vst.msk [vmem:[%s173 + $0x388] sm:$0xff] %vm1718, %v1575
      %1833 = vst.msk [vmem:[%s173 + $0x390] sm:$0xff] %vm1718, %v1576
      %1834 = vst.msk [vmem:[%s173 + $0x398] sm:$0xff] %vm1718, %v1577
      %1835 = vst.msk [vmem:[%s173 + $0x3a0] sm:$0xff] %vm1718, %v1578
      %1836 = vst.msk [vmem:[%s173 + $0x3a8] sm:$0xff] %vm1718, %v1579
      %1837 = vst.msk [vmem:[%s173 + $0x3b0] sm:$0xff] %vm1718, %v1580
      %1838 = vst.msk [vmem:[%s173 + $0x3b8] sm:$0xff] %vm1718, %v1581
      %1839 = vst.msk [vmem:[%s173 + $0x3c0] sm:$0xff] %vm1718, %v1582
      %1840 = vst.msk [vmem:[%s173 + $0x3c8] sm:$0xff] %vm1718, %v1583
      %1841 = vst.msk [vmem:[%s173 + $0x3d0] sm:$0xff] %vm1718, %v1584
      %1842 = vst.msk [vmem:[%s173 + $0x3d8] sm:$0xff] %vm1718, %v1585
      %1843 = vst.msk [vmem:[%s173 + $0x3e0] sm:$0xff] %vm1718, %v1586
      %1844 = vst.msk [vmem:[%s173 + $0x3e8] sm:$0xff] %vm1718, %v1587
      %1845 = vst.msk [vmem:[%s173 + $0x3f0] sm:$0xff] %vm1718, %v1588
      %1846 = vst.msk [vmem:[%s173 + $0x3f8] sm:$0xff] %vm1718, %v1589
      %1847 = vst.msk [vmem:[%s173 + $0x400] sm:$0xff] %vm1718, %v1590
      %1848 = vst.msk [vmem:[%s173 + $0x408] sm:$0xff] %vm1718, %v1591
      %1849 = vst.msk [vmem:[%s173 + $0x410] sm:$0xff] %vm1718, %v1592
      %1850 = vst.msk [vmem:[%s173 + $0x418] sm:$0xff] %vm1718, %v1593
      %1851 = vst.msk [vmem:[%s173 + $0x420] sm:$0xff] %vm1718, %v1594
      %1852 = vst.msk [vmem:[%s173 + $0x428] sm:$0xff] %vm1718, %v1595
      %1853 = vst.msk [vmem:[%s173 + $0x430] sm:$0xff] %vm1718, %v1596
      %1854 = vst.msk [vmem:[%s173 + $0x438] sm:$0xff] %vm1718, %v1597
      %1855 = vst.msk [vmem:[%s173 + $0x440] sm:$0xff] %vm1718, %v1598
      %1856 = vst.msk [vmem:[%s173 + $0x448] sm:$0xff] %vm1718, %v1599
      %1857 = vst.msk [vmem:[%s173 + $0x450] sm:$0xff] %vm1718, %v1600
      %1858 = vst.msk [vmem:[%s173 + $0x458] sm:$0xff] %vm1718, %v1601
      %1859 = vst.msk [vmem:[%s173 + $0x460] sm:$0xff] %vm1718, %v1602
      %1860 = vst.msk [vmem:[%s173 + $0x468] sm:$0xff] %vm1718, %v1603
      %1861 = vst.msk [vmem:[%s173 + $0x470] sm:$0xff] %vm1718, %v1604
      %1862 = vst.msk [vmem:[%s173 + $0x478] sm:$0xff] %vm1718, %v1605
      %1863 = vst.msk [vmem:[%s173 + $0x480] sm:$0xff] %vm1718, %v1606
      %1864 = vst.msk [vmem:[%s173 + $0x488] sm:$0xff] %vm1718, %v1607
      %1865 = vst.msk [vmem:[%s173 + $0x490] sm:$0xff] %vm1718, %v1608
      %1866 = vst.msk [vmem:[%s173 + $0x498] sm:$0xff] %vm1718, %v1609
      %1867 = vst.msk [vmem:[%s173 + $0x4a0] sm:$0xff] %vm1718, %v1610
      %1868 = vst.msk [vmem:[%s173 + $0x4a8] sm:$0xff] %vm1718, %v1611
      %1869 = vst.msk [vmem:[%s173 + $0x4b0] sm:$0xff] %vm1718, %v1612
      %1870 = vst.msk [vmem:[%s173 + $0x4b8] sm:$0xff] %vm1718, %v1613
      %1871 = vst.msk [vmem:[%s173 + $0x4c0] sm:$0xff] %vm1718, %v1614
      %1872 = vst.msk [vmem:[%s173 + $0x4c8] sm:$0xff] %vm1718, %v1615
      %1873 = vst.msk [vmem:[%s173 + $0x4d0] sm:$0xff] %vm1718, %v1616
      %1874 = vst.msk [vmem:[%s173 + $0x4d8] sm:$0xff] %vm1718, %v1617
      %1875 = vst.msk [vmem:[%s173 + $0x4e0] sm:$0xff] %vm1718, %v1618
      %1876 = vst.msk [vmem:[%s173 + $0x4e8] sm:$0xff] %vm1718, %v1619
      %1877 = vst.msk [vmem:[%s173 + $0x4f0] sm:$0xff] %vm1718, %v1620
      %1878 = vst.msk [vmem:[%s173 + $0x4f8] sm:$0xff] %vm1718, %v1621
      %1879 = vst.msk [vmem:[%s173 + $0x500] sm:$0xff] %vm1718, %v1622
      %1880 = vst.msk [vmem:[%s173 + $0x508] sm:$0xff] %vm1718, %v1623
      %1881 = vst.msk [vmem:[%s173 + $0x510] sm:$0xff] %vm1718, %v1624
      %1882 = vst.msk [vmem:[%s173 + $0x518] sm:$0xff] %vm1718, %v1625
      %1883 = vst.msk [vmem:[%s173 + $0x520] sm:$0xff] %vm1718, %v1626
      %1884 = vst.msk [vmem:[%s173 + $0x528] sm:$0xff] %vm1718, %v1627
      %1885 = vst.msk [vmem:[%s173 + $0x530] sm:$0xff] %vm1718, %v1628
      %1886 = vst.msk [vmem:[%s173 + $0x538] sm:$0xff] %vm1718, %v1629
      %1887 = vst.msk [vmem:[%s173 + $0x540] sm:$0xff] %vm1718, %v1630
      %1888 = vst.msk [vmem:[%s173 + $0x548] sm:$0xff] %vm1718, %v1631
      %1889 = vst.msk [vmem:[%s173 + $0x550] sm:$0xff] %vm1718, %v1632
      %1890 = vst.msk [vmem:[%s173 + $0x558] sm:$0xff] %vm1718, %v1633
      %1891 = vst.msk [vmem:[%s173 + $0x560] sm:$0xff] %vm1718, %v1634
      %1892 = vst.msk [vmem:[%s173 + $0x568] sm:$0xff] %vm1718, %v1635
      %1893 = vst.msk [vmem:[%s173 + $0x570] sm:$0xff] %vm1718, %v1636
      %1894 = vst.msk [vmem:[%s173 + $0x578] sm:$0xff] %vm1718, %v1637
      %1895 = vst.msk [vmem:[%s173 + $0x580] sm:$0xff] %vm1718, %v1638
      %1896 = vst.msk [vmem:[%s173 + $0x588] sm:$0xff] %vm1718, %v1639
      %1897 = vst.msk [vmem:[%s173 + $0x590] sm:$0xff] %vm1718, %v1640
      %1898 = vst.msk [vmem:[%s173 + $0x598] sm:$0xff] %vm1718, %v1641
      %1899 = vst.msk [vmem:[%s173 + $0x5a0] sm:$0xff] %vm1718, %v1642
      %1900 = vst.msk [vmem:[%s173 + $0x5a8] sm:$0xff] %vm1718, %v1643
      %1901 = vst.msk [vmem:[%s173 + $0x5b0] sm:$0xff] %vm1718, %v1644
      %1902 = vst.msk [vmem:[%s173 + $0x5b8] sm:$0xff] %vm1718, %v1645
      %1903 = vst.msk [vmem:[%s173 + $0x5c0] sm:$0xff] %vm1718, %v1646
      %1904 = vst.msk [vmem:[%s173 + $0x5c8] sm:$0xff] %vm1718, %v1647
      %1905 = vst.msk [vmem:[%s173 + $0x5d0] sm:$0xff] %vm1718, %v1648
      %1906 = vst.msk [vmem:[%s173 + $0x5d8] sm:$0xff] %vm1718, %v1649
      %1907 = vst.msk [vmem:[%s173 + $0x5e0] sm:$0xff] %vm1718, %v1650
      %1908 = vst.msk [vmem:[%s173 + $0x5e8] sm:$0xff] %vm1718, %v1651
      %1909 = vst.msk [vmem:[%s173 + $0x5f0] sm:$0xff] %vm1718, %v1652
      %1910 = vst.msk [vmem:[%s173 + $0x5f8] sm:$0xff] %vm1718, %v1653
      %1911 = vst.msk [vmem:[%s173 + $0x600] sm:$0xff] %vm1718, %v1654
      %1912 = vst.msk [vmem:[%s173 + $0x608] sm:$0xff] %vm1718, %v1655
      %1913 = vst.msk [vmem:[%s173 + $0x610] sm:$0xff] %vm1718, %v1656
      %1914 = vst.msk [vmem:[%s173 + $0x618] sm:$0xff] %vm1718, %v1657
      %1915 = vst.msk [vmem:[%s173 + $0x620] sm:$0xff] %vm1718, %v1658
      %1916 = vst.msk [vmem:[%s173 + $0x628] sm:$0xff] %vm1718, %v1659
      %1917 = vst.msk [vmem:[%s173 + $0x630] sm:$0xff] %vm1718, %v1660
      %1918 = vst.msk [vmem:[%s173 + $0x638] sm:$0xff] %vm1718, %v1661
      %1919 = vst.msk [vmem:[%s173 + $0x640] sm:$0xff] %vm1718, %v1662
      %1920 = vst.msk [vmem:[%s173 + $0x648] sm:$0xff] %vm1718, %v1663
      %1921 = vst.msk [vmem:[%s173 + $0x650] sm:$0xff] %vm1718, %v1664
      %1922 = vst.msk [vmem:[%s173 + $0x658] sm:$0xff] %vm1718, %v1665
      %1923 = vst.msk [vmem:[%s173 + $0x660] sm:$0xff] %vm1718, %v1666
      %1924 = vst.msk [vmem:[%s173 + $0x668] sm:$0xff] %vm1718, %v1667
      %1925 = vst.msk [vmem:[%s173 + $0x670] sm:$0xff] %vm1718, %v1668
      %1926 = vst.msk [vmem:[%s173 + $0x678] sm:$0xff] %vm1718, %v1669
      %1927 = vst.msk [vmem:[%s173 + $0x680] sm:$0xff] %vm1718, %v1670
      %1928 = vst.msk [vmem:[%s173 + $0x688] sm:$0xff] %vm1718, %v1671
      %1929 = vst.msk [vmem:[%s173 + $0x690] sm:$0xff] %vm1718, %v1672
      %1930 = vst.msk [vmem:[%s173 + $0x698] sm:$0xff] %vm1718, %v1673
      %1931 = vst.msk [vmem:[%s173 + $0x6a0] sm:$0xff] %vm1718, %v1674
      %1932 = vst.msk [vmem:[%s173 + $0x6a8] sm:$0xff] %vm1718, %v1675
      %1933 = vst.msk [vmem:[%s173 + $0x6b0] sm:$0xff] %vm1718, %v1676
      %1934 = vst.msk [vmem:[%s173 + $0x6b8] sm:$0xff] %vm1718, %v1677
      %1935 = vst.msk [vmem:[%s173 + $0x6c0] sm:$0xff] %vm1718, %v1678
      %1936 = vst.msk [vmem:[%s173 + $0x6c8] sm:$0xff] %vm1718, %v1679
      %1937 = vst.msk [vmem:[%s173 + $0x6d0] sm:$0xff] %vm1718, %v1680
      %1938 = vst.msk [vmem:[%s173 + $0x6d8] sm:$0xff] %vm1718, %v1681
      %1939 = vst.msk [vmem:[%s173 + $0x6e0] sm:$0xff] %vm1718, %v1682
      %1940 = vst.msk [vmem:[%s173 + $0x6e8] sm:$0xff] %vm1718, %v1683
      %1941 = vst.msk [vmem:[%s173 + $0x6f0] sm:$0xff] %vm1718, %v1684
      %1942 = vst.msk [vmem:[%s173 + $0x6f8] sm:$0xff] %vm1718, %v1685
      %1943 = vst.msk [vmem:[%s173 + $0x700] sm:$0xff] %vm1718, %v1686
      %1944 = vst.msk [vmem:[%s173 + $0x708] sm:$0xff] %vm1718, %v1687
      %1945 = vst.msk [vmem:[%s173 + $0x710] sm:$0xff] %vm1718, %v1688
      %1946 = vst.msk [vmem:[%s173 + $0x718] sm:$0xff] %vm1718, %v1689
      %1947 = vst.msk [vmem:[%s173 + $0x720] sm:$0xff] %vm1718, %v1690
      %1948 = vst.msk [vmem:[%s173 + $0x728] sm:$0xff] %vm1718, %v1691
      %1949 = vst.msk [vmem:[%s173 + $0x730] sm:$0xff] %vm1718, %v1692
      %1950 = vst.msk [vmem:[%s173 + $0x738] sm:$0xff] %vm1718, %v1693
      %1951 = vst.msk [vmem:[%s173 + $0x740] sm:$0xff] %vm1718, %v1694
      %1952 = vst.msk [vmem:[%s173 + $0x748] sm:$0xff] %vm1718, %v1695
      %1953 = vst.msk [vmem:[%s173 + $0x750] sm:$0xff] %vm1718, %v1696
      %1954 = vst.msk [vmem:[%s173 + $0x758] sm:$0xff] %vm1718, %v1697
      %1955 = vst.msk [vmem:[%s173 + $0x760] sm:$0xff] %vm1718, %v1698
      %1956 = vst.msk [vmem:[%s173 + $0x768] sm:$0xff] %vm1718, %v1699
      %1957 = vst.msk [vmem:[%s173 + $0x770] sm:$0xff] %vm1718, %v1700
      %1958 = vst.msk [vmem:[%s173 + $0x778] sm:$0xff] %vm1718, %v1701
      %1959 = vst.msk [vmem:[%s173 + $0x780] sm:$0xff] %vm1718, %v1702
      %1960 = vst.msk [vmem:[%s173 + $0x788] sm:$0xff] %vm1718, %v1703
      %1961 = vst.msk [vmem:[%s173 + $0x790] sm:$0xff] %vm1718, %v1704
      %1962 = vst.msk [vmem:[%s173 + $0x798] sm:$0xff] %vm1718, %v1705
      %1963 = vst.msk [vmem:[%s173 + $0x7a0] sm:$0xff] %vm1718, %v1706
      %1964 = vst.msk [vmem:[%s173 + $0x7a8] sm:$0xff] %vm1718, %v1707
      %1965 = vst.msk [vmem:[%s173 + $0x7b0] sm:$0xff] %vm1718, %v1708
      %1966 = vst.msk [vmem:[%s173 + $0x7b8] sm:$0xff] %vm1718, %v1709
      %1967 = vst.msk [vmem:[%s173 + $0x7c0] sm:$0xff] %vm1718, %v1710
      %1968 = vst.msk [vmem:[%s173 + $0x7c8] sm:$0xff] %vm1718, %v1711
      %1969 = vst.msk [vmem:[%s173 + $0x7d0] sm:$0xff] %vm1718, %v1712
      %1970 = vst.msk [vmem:[%s173 + $0x7d8] sm:$0xff] %vm1718, %v1713
      %1971 = vst.msk [vmem:[%s173 + $0x7e0] sm:$0xff] %vm1718, %v1714
      %1972 = vst.msk [vmem:[%s173 + $0x7e8] sm:$0xff] %vm1718, %v1715
      %1973 = vst.msk [vmem:[%s173 + $0x7f0] sm:$0xff] %vm1718, %v1716
      %1974 = vst.msk [vmem:[%s173 + $0x7f8] sm:$0xff] %vm1718, %v1717
      %s1975 = smul.u32 256, %s15
      %p1976 = scmp.lt.s32.totalorder %s1975, 511
      %s1977 = scalar_select %p1976, %s1975, 511
      %s1978 = smul.addr %s1977, 8
      %s1979 = scalar_lea.vmem %s3, %s1978
      // Predicated region
      $region33: #{tpu_custom_call.1} parent=31 // pred_check
        %p1980 = pneg %p101
      $region34: #{tpu_custom_call.1} parent=31 // pred_check_branch
        %1982 = sbr.rel (%p1980) target = $region36
      $region35: #{tpu_custom_call.1} parent=31 // pred_region
        %s1983 = smul.u32 256, %s15
      $region36: #{tpu_custom_call.1} parent=31 // pred_fallthru
        _
    $region32: #{tpu_custom_call.1} parent=5 // pred_fallthru
      _
    %p1984 = scmp.le.s32.totalorder 2, %s10
    // Predicated region
    $region37: #{tpu_custom_call.1} parent=5 // pred_check
      %p1985 = pneg %p1984
    $region38: #{tpu_custom_call.1} parent=5 // pred_check_branch
      %1987 = sbr.rel (%p1985) target = $region40
    $region39: #{tpu_custom_call.1} parent=5 // pred_region
      %s1988 = ssub.s32 %s10, 2
      // Predicated region
      $region41: #{tpu_custom_call.1} parent=39 // pred_check
        %p1989 = pneg %p107
      $region42: #{tpu_custom_call.1} parent=39 // pred_check_branch
        %1991 = sbr.rel (%p1989) target = $region44
      $region43: #{tpu_custom_call.1} parent=39 // pred_region
        %s1992 = smul.u32 256, %s16
        %p1993 = scmp.lt.s32.totalorder %s1992, 511
        %s1994 = scalar_select %p1993, %s1992, 511
        %s1995 = smul.addr %s1994, 8
        %s1996 = scalar_lea.vmem %s3, %s1995
      $region44: #{tpu_custom_call.1} parent=39 // pred_fallthru
        _
    $region40: #{tpu_custom_call.1} parent=5 // pred_fallthru
      _
  $region6: #{tpu_custom_call.1} parent=0 // loop_footer
    %s14 = sadd.s32 1, %s10
  $region7: #{tpu_custom_call.1} parent=0 // loop_footer_branch
    %9 = sbr.rel target = $region3
  $region8: #{tpu_custom_call.1} parent=0 // loop_exit
    _

</llo_original>
